<compile_context>
chip_gen: v5e
topology: v5e:2x2
jax: 0.10.0
libtpu: 0.0.40
codegen_flags: <defaults>
</compile_context>

<pallas_src>
import jax
import jax.numpy as jnp
from jax.experimental import pallas as pl
from jax.experimental.pallas import tpu as pltpu

# ---- model config (SimpleTransformer(vocab_size=20, d_model=64, nhead=4, num_layers=2)) ----
VOCAB = 20
D_MODEL = 64
NHEAD = 4
HEAD_DIM = D_MODEL // NHEAD
DFF = 128
NUM_LAYERS = 2
MAX_POS = 100
LN_EPS = 1e-5

# rows of the packed per-layer (16, D) vector slab
ROW_BQ, ROW_BK, ROW_BV, ROW_BOUT = 0, 1, 2, 3
ROW_LN1W, ROW_LN1B, ROW_LN2W, ROW_LN2B, ROW_BFF2 = 4, 5, 6, 7, 8


def _layer_norm(x, w, b):
    # single-pass statistics (one fewer full pass over x than mean-then-centered-mean)
    s1 = jnp.sum(x, axis=-1, keepdims=True)
    s2 = jnp.sum(x * x, axis=-1, keepdims=True)
    mu = s1 * (1.0 / D_MODEL)
    var = jnp.maximum(s2 * (1.0 / D_MODEL) - mu * mu, 0.0)
    return (x - mu) * jax.lax.rsqrt(var + LN_EPS) * w + b


def transformer_kernel(
    x_ref,       # (1, TB, S, D) f32   embedded tokens for this batch tile
    pos_ref,     # (S, D)        f32   positional encoding slice
    bias_ref,    # (GS, GS)      f32   block-diagonal same-sequence attention bias
    hmask_ref,   # (NHEAD, D)    bf16  per-head lane masks over d_model
    wq_ref,      # (L, D, D)     bf16  query projection (pre-transposed)
    wk_ref,      # (L, D, D)     bf16
    wv_ref,      # (L, D, D)     bf16
    wout_ref,    # (L, D, D)     bf16  attention out-projection
    wff1_ref,    # (L, D, DFF)   bf16
    wff2_ref,    # (L, DFF, D)   bf16
    vecd_ref,    # (L, 16, D)    f32   packed biases / LN params
    bff1_ref,    # (L, 1, DFF)   f32   FF1 bias (exactly one 128-lane tile)
    out_ref,     # (1, TB//2, 2*D) f32 lane-dense pooled output
):
    _, TB, S, D = x_ref.shape
    M = TB * S
    GS = bias_ref.shape[0]        # rows per attention group = (sequences per group) * S
    NGRP = M // GS
    scale = 1.0 / (HEAD_DIM ** 0.5)

    x = x_ref[0]                                          # (TB, S, D)
    pos = pos_ref[...]                                    # (S, D)
    h3 = x + pos[None, :, :]

    # key-padding mask exactly as the torch module: (embedding + pos).sum(-1) == 0
    keep_bs = (jnp.sum(h3, axis=-1) != 0.0).astype(jnp.float32)       # (TB, S)  for pooling
    hg = h3.reshape(NGRP, GS, D)
    keep_g = (jnp.sum(hg, axis=-1) != 0.0).astype(jnp.float32)        # (NGRP, GS)
    key_bias = ((keep_g - 1.0) * 1e9)[:, None, :]                     # (NGRP, 1, GS)
    seq_bias = bias_ref[...][None, :, :]                              # (1, GS, GS)
    hm_all = hmask_ref[...]                                           # (NHEAD, D) bf16

    h = h3.reshape(M, D)                                  # fused (batch*seq, D) activations, f32

    for layer in range(NUM_LAYERS):
        vd = vecd_ref[layer]                              # (16, D)
        b_q = vd[ROW_BQ:ROW_BQ + 1, :]
        b_k = vd[ROW_BK:ROW_BK + 1, :]
        b_v = vd[ROW_BV:ROW_BV + 1, :]
        b_out = vd[ROW_BOUT:ROW_BOUT + 1, :]
        ln1w, ln1b = vd[ROW_LN1W:ROW_LN1W + 1, :], vd[ROW_LN1B:ROW_LN1B + 1, :]
        ln2w, ln2b = vd[ROW_LN2W:ROW_LN2W + 1, :], vd[ROW_LN2B:ROW_LN2B + 1, :]
        b_ff2 = vd[ROW_BFF2:ROW_BFF2 + 1, :]
        b_ff1 = bff1_ref[layer]                           # (1, DFF)

        # ---- multi-head self-attention (bf16 MXU, f32 accumulate) ----
        hb = h.astype(jnp.bfloat16)
        q = jnp.dot(hb, wq_ref[layer], preferred_element_type=jnp.float32) + b_q
        k = jnp.dot(hb, wk_ref[layer], preferred_element_type=jnp.float32) + b_k
        v = jnp.dot(hb, wv_ref[layer], preferred_element_type=jnp.float32) + b_v

        qg = q.astype(jnp.bfloat16).reshape(NGRP, GS, D)
        k16 = k.astype(jnp.bfloat16)
        v16 = v.astype(jnp.bfloat16)

        # heads separated by lane masks on K/V (no 16-lane slices, no concats):
        #   Q . (K * mask_h)  over all 64 lanes  ==  per-head Q_h . K_h
        ctx = None
        for hd in range(NHEAD):
            hm = hm_all[hd:hd + 1, :]                                     # (1, D) bf16
            kh = (k16 * hm).reshape(NGRP, GS, D)
            vh = (v16 * hm).reshape(NGRP, GS, D)
            s = jnp.einsum('gqd,gkd->gqk', qg, kh,
                           preferred_element_type=jnp.float32) * scale    # (NGRP, GS, GS)
            s = s + seq_bias + key_bias
            m = jnp.max(s, axis=-1, keepdims=True)
            e = jnp.exp(s - m)
            p = e / jnp.sum(e, axis=-1, keepdims=True)                    # exact divide (f32)
            c = jnp.einsum('gqk,gkd->gqd', p.astype(jnp.bfloat16), vh,
                           preferred_element_type=jnp.float32)            # head-h lanes only
            ctx = c if ctx is None else ctx + c

        attn = jnp.dot(ctx.reshape(M, D).astype(jnp.bfloat16), wout_ref[layer],
                       preferred_element_type=jnp.float32) + b_out
        h = _layer_norm(h + attn, ln1w, ln1b)

        # ---- feed-forward (relu) ----
        f = jnp.dot(h.astype(jnp.bfloat16), wff1_ref[layer],
                    preferred_element_type=jnp.float32) + b_ff1
        f = jnp.maximum(f, 0.0)
        f = jnp.dot(f.astype(jnp.bfloat16), wff2_ref[layer],
                    preferred_element_type=jnp.float32) + b_ff2
        h = _layer_norm(h + f, ln2w, ln2b)

    # ---- masked mean pooling over the sequence ----
    hf = h.reshape(TB, S, D)
    denom = jnp.maximum(jnp.sum(keep_bs, axis=1, keepdims=True), 1.0)     # (TB, 1)
    pooled = jnp.sum(hf * keep_bs[:, :, None], axis=1) / denom            # (TB, D)

    # lane-dense 128-wide store: [rows 0..TB/2) | rows TB/2..TB) ] side by side
    half = TB // 2
    out_ref[0] = jnp.concatenate([pooled[:half, :], pooled[half:, :]], axis=-1)


def init_params(key):
    ks = jax.random.split(key, 8)

    def n(k, shape, scl, dtype=jnp.float32):
        return (scl * jax.random.normal(k, shape)).astype(dtype)

    L, D = NUM_LAYERS, D_MODEL
    params = {
        "embedding": n(ks[0], (VOCAB, D), 1.0),                      # nn.Embedding ~ N(0,1)
        "pos": n(ks[1], (MAX_POS, D), 1.0),                          # torch.randn(100, d_model)
        # matmul-ready (pre-transposed) bf16 weights
        "wq": n(ks[2], (L, D, D), 0.02, jnp.bfloat16),
        "wk": n(ks[3], (L, D, D), 0.02, jnp.bfloat16),
        "wv": n(ks[4], (L, D, D), 0.02, jnp.bfloat16),
        "wout": n(ks[5], (L, D, D), 0.02, jnp.bfloat16),
        "wff1": n(ks[6], (L, D, DFF), 0.02, jnp.bfloat16),
        "wff2": n(ks[7], (L, DFF, D), 0.02, jnp.bfloat16),
    }
    # packed per-layer vectors: [bq, bk, bv, bout, ln1w, ln1b, ln2w, ln2b, bff2, pad...]
    vec_d = jnp.zeros((L, 16, D), jnp.float32)
    vec_d = vec_d.at[:, ROW_LN1W, :].set(1.0)
    vec_d = vec_d.at[:, ROW_LN2W, :].set(1.0)
    params["vec_d"] = vec_d
    params["bff1"] = jnp.zeros((L, 1, DFF), jnp.float32)
    return params


@jax.jit
def simple_transformer(tokens, params):
    B, S = tokens.shape
    D = D_MODEL

    # --- tiling: ~1024 fused rows per grid step; >=2 steps when batch allows (v7x 2 TCs);
    #     tb even (lane-dense output packing) and a multiple of the attention group size.
    tb = max(1, min(B, 1024 // max(S, 1)))
    if tb >= B and B >= 4:
        tb = (B + 1) // 2
    if tb % 2:
        tb += 1
    g = max(1, min(128 // max(S, 1), tb))      # sequences per attention group (GS = g*S <= 128)
    tb = -(-tb // g) * g                       # multiple of g
    if tb % 2:
        tb += g                                # keep even (only possible when g is odd)
    nsteps = -(-B // tb)
    b_pad = nsteps * tb
    gs = g * S

    x = params["embedding"][tokens].astype(jnp.float32)              # (B, S, D)
    if b_pad != B:
        x = jnp.concatenate([x, jnp.zeros((b_pad - B, S, D), x.dtype)], axis=0)
    x = x.reshape(nsteps, tb, S, D)
    pos = params["pos"][:S]                                          # (S, D)

    # block-diagonal same-sequence bias and per-head lane masks (computed once, resident)
    seq_id = jnp.arange(gs, dtype=jnp.int32) // S
    attn_bias = jnp.where(seq_id[:, None] == seq_id[None, :], 0.0, -1e9).astype(jnp.float32)
    head_mask = (jnp.arange(D, dtype=jnp.int32)[None, :] // HEAD_DIM
                 == jnp.arange(NHEAD, dtype=jnp.int32)[:, None]).astype(jnp.bfloat16)

    def resident(a):
        return pl.BlockSpec(a.shape, lambda i, n=a.ndim: (0,) * n)

    out = pl.pallas_call(
        transformer_kernel,
        out_shape=jax.ShapeDtypeStruct((nsteps, tb // 2, 2 * D), jnp.float32),
        grid_spec=pltpu.PrefetchScalarGridSpec(
            num_scalar_prefetch=0,
            grid=(nsteps,),
            in_specs=[
                pl.BlockSpec((1, tb, S, D), lambda i: (i, 0, 0, 0)),
                pl.BlockSpec((S, D), lambda i: (0, 0)),
                resident(attn_bias),
                resident(head_mask),
                resident(params["wq"]), resident(params["wk"]), resident(params["wv"]),
                resident(params["wout"]), resident(params["wff1"]), resident(params["wff2"]),
                resident(params["vec_d"]), resident(params["bff1"]),
            ],
            out_specs=pl.BlockSpec((1, tb // 2, 2 * D), lambda i: (i, 0, 0)),
        ),
        compiler_params=pltpu.CompilerParams(
            dimension_semantics=("parallel",),
            vmem_limit_bytes=32 * 1024 * 1024,
        ),
    )(x, pos, attn_bias, head_mask,
      params["wq"], params["wk"], params["wv"], params["wout"],
      params["wff1"], params["wff2"], params["vec_d"], params["bff1"])

    # un-pack the lane-dense (tb//2, 128) rows back to (b_pad, D)
    out = jnp.concatenate([out[:, :, :D], out[:, :, D:]], axis=1)    # (nsteps, tb, D)
    return out.reshape(b_pad, D)[:B]


if __name__ == "__main__":
    key = jax.random.PRNGKey(0)
    pkey, tkey = jax.random.split(key)
    params = init_params(pkey)

    B, S = 2, 8
    tokens = jax.random.randint(tkey, (B, S), 0, VOCAB, dtype=jnp.int32)

    out = simple_transformer(tokens, params)
    jax.block_until_ready(out)
    assert out.shape == (B, D_MODEL) and out.dtype == jnp.float32
    assert bool(jnp.all(jnp.isfinite(out)))
    # TODO(synk): dropout(p=0.1) is a no-op (eval-mode semantics); PyTorch's -inf key-padding
    # mask / NaN mean for fully-masked rows is replaced by a -1e9 bias and a guarded denominator.
    print("KERNEL_OK")
</pallas_src>

<mosaic_0001>
module attributes {stable_mosaic.version = 11 : i64} {
  func.func @transformer_kernel(%arg0: i32, %arg1: memref<1x2x8x64xf32, #tpu.memory_space<vmem>>, %arg2: memref<8x64xf32, #tpu.memory_space<vmem>>, %arg3: memref<16x16xf32, #tpu.memory_space<vmem>>, %arg4: memref<4x64xbf16, #tpu.memory_space<vmem>>, %arg5: memref<2x64x64xbf16, #tpu.memory_space<vmem>>, %arg6: memref<2x64x64xbf16, #tpu.memory_space<vmem>>, %arg7: memref<2x64x64xbf16, #tpu.memory_space<vmem>>, %arg8: memref<2x64x64xbf16, #tpu.memory_space<vmem>>, %arg9: memref<2x64x128xbf16, #tpu.memory_space<vmem>>, %arg10: memref<2x128x64xbf16, #tpu.memory_space<vmem>>, %arg11: memref<2x16x64xf32, #tpu.memory_space<vmem>>, %arg12: memref<2x1x128xf32, #tpu.memory_space<vmem>>, %arg13: memref<1x1x128xf32, #tpu.memory_space<vmem>>) attributes {dimension_semantics = [#tpu.dimension_semantics<parallel>], iteration_bounds = array<i64: 1>, scalar_prefetch = 0 : i64, scratch_operands = 0 : i64, tpu.core_type = #tpu.core_type<tc>, window_params = [{transform_indices = @transform_0, window_bounds = array<i64: 1, 2, 8, 64>}, {pipeline_mode = #tpu.pipeline_mode<synchronous>, transform_indices = @transform_1, window_bounds = array<i64: 8, 64>}, {pipeline_mode = #tpu.pipeline_mode<synchronous>, transform_indices = @transform_2, window_bounds = array<i64: 16, 16>}, {pipeline_mode = #tpu.pipeline_mode<synchronous>, transform_indices = @transform_3, window_bounds = array<i64: 4, 64>}, {pipeline_mode = #tpu.pipeline_mode<synchronous>, transform_indices = @transform_4, window_bounds = array<i64: 2, 64, 64>}, {pipeline_mode = #tpu.pipeline_mode<synchronous>, transform_indices = @transform_5, window_bounds = array<i64: 2, 64, 64>}, {pipeline_mode = #tpu.pipeline_mode<synchronous>, transform_indices = @transform_6, window_bounds = array<i64: 2, 64, 64>}, {pipeline_mode = #tpu.pipeline_mode<synchronous>, transform_indices = @transform_7, window_bounds = array<i64: 2, 64, 64>}, {pipeline_mode = #tpu.pipeline_mode<synchronous>, transform_indices = @transform_8, window_bounds = array<i64: 2, 64, 128>}, {pipeline_mode = #tpu.pipeline_mode<synchronous>, transform_indices = @transform_9, window_bounds = array<i64: 2, 128, 64>}, {pipeline_mode = #tpu.pipeline_mode<synchronous>, transform_indices = @transform_10, window_bounds = array<i64: 2, 16, 64>}, {pipeline_mode = #tpu.pipeline_mode<synchronous>, transform_indices = @transform_11, window_bounds = array<i64: 2, 1, 128>}, {transform_indices = @transform_12, window_bounds = array<i64: 1, 1, 128>}]} {
    %c0 = arith.constant 0 : index
    %c0_0 = arith.constant 0 : index
    %c0_1 = arith.constant 0 : index
    %c0_2 = arith.constant 0 : index
    %0 = vector.load %arg1[%c0, %c0_0, %c0_1, %c0_2] : memref<1x2x8x64xf32, #tpu.memory_space<vmem>>, vector<1x2x8x64xf32>
    %1 = vector.shape_cast %0 : vector<1x2x8x64xf32> to vector<2x8x64xf32>
    %c0_3 = arith.constant 0 : index
    %c0_4 = arith.constant 0 : index
    %2 = vector.load %arg2[%c0_3, %c0_4] : memref<8x64xf32, #tpu.memory_space<vmem>>, vector<8x64xf32>
    %3 = vector.shape_cast %2 : vector<8x64xf32> to vector<1x8x64xf32>
    %4 = vector.broadcast %3 : vector<1x8x64xf32> to vector<2x8x64xf32>
    %5 = arith.addf %1, %4 : vector<2x8x64xf32>
    %cst = arith.constant dense<0.000000e+00> : vector<2x8xf32>
    %6 = vector.multi_reduction <add>, %5, %cst [2] : vector<2x8x64xf32> to vector<2x8xf32>
    %cst_5 = arith.constant 0.000000e+00 : f32
    %7 = vector.broadcast %cst_5 : f32 to vector<2x8xf32>
    %8 = arith.cmpf one, %6, %7 : vector<2x8xf32>
    %9 = arith.extui %8 : vector<2x8xi1> to vector<2x8xi32>
    %10 = arith.sitofp %9 : vector<2x8xi32> to vector<2x8xf32>
    %11 = vector.shape_cast %5 : vector<2x8x64xf32> to vector<1x16x64xf32>
    %cst_6 = arith.constant dense<0.000000e+00> : vector<1x16xf32>
    %12 = vector.multi_reduction <add>, %11, %cst_6 [2] : vector<1x16x64xf32> to vector<1x16xf32>
    %cst_7 = arith.constant 0.000000e+00 : f32
    %13 = vector.broadcast %cst_7 : f32 to vector<1x16xf32>
    %14 = arith.cmpf one, %12, %13 : vector<1x16xf32>
    %15 = arith.extui %14 : vector<1x16xi1> to vector<1x16xi32>
    %16 = arith.sitofp %15 : vector<1x16xi32> to vector<1x16xf32>
    %cst_8 = arith.constant 1.000000e+00 : f32
    %17 = vector.broadcast %cst_8 : f32 to vector<1x16xf32>
    %18 = arith.subf %16, %17 : vector<1x16xf32>
    %cst_9 = arith.constant 1.000000e+09 : f32
    %19 = vector.broadcast %cst_9 : f32 to vector<1x16xf32>
    %20 = arith.mulf %18, %19 : vector<1x16xf32>
    %21 = vector.shape_cast %20 : vector<1x16xf32> to vector<1x1x16xf32>
    %c0_10 = arith.constant 0 : index
    %c0_11 = arith.constant 0 : index
    %22 = vector.load %arg3[%c0_10, %c0_11] : memref<16x16xf32, #tpu.memory_space<vmem>>, vector<16x16xf32>
    %23 = vector.shape_cast %22 : vector<16x16xf32> to vector<1x16x16xf32>
    %c0_12 = arith.constant 0 : index
    %c0_13 = arith.constant 0 : index
    %24 = vector.load %arg4[%c0_12, %c0_13] : memref<4x64xbf16, #tpu.memory_space<vmem>>, vector<4x64xbf16>
    %25 = vector.shape_cast %5 : vector<2x8x64xf32> to vector<16x64xf32>
    %c0_14 = arith.constant 0 : index
    %c0_15 = arith.constant 0 : index
    %c0_16 = arith.constant 0 : index
    %26 = vector.load %arg11[%c0_14, %c0_15, %c0_16] : memref<2x16x64xf32, #tpu.memory_space<vmem>>, vector<1x16x64xf32>
    %27 = vector.shape_cast %26 : vector<1x16x64xf32> to vector<16x64xf32>
    %28 = vector.extract_strided_slice %27 {offsets = [0, 0], sizes = [1, 64], strides = [1, 1]} : vector<16x64xf32> to vector<1x64xf32>
    %29 = vector.extract_strided_slice %27 {offsets = [1, 0], sizes = [1, 64], strides = [1, 1]} : vector<16x64xf32> to vector<1x64xf32>
    %30 = vector.extract_strided_slice %27 {offsets = [2, 0], sizes = [1, 64], strides = [1, 1]} : vector<16x64xf32> to vector<1x64xf32>
    %31 = vector.extract_strided_slice %27 {offsets = [3, 0], sizes = [1, 64], strides = [1, 1]} : vector<16x64xf32> to vector<1x64xf32>
    %32 = vector.extract_strided_slice %27 {offsets = [4, 0], sizes = [1, 64], strides = [1, 1]} : vector<16x64xf32> to vector<1x64xf32>
    %33 = vector.extract_strided_slice %27 {offsets = [5, 0], sizes = [1, 64], strides = [1, 1]} : vector<16x64xf32> to vector<1x64xf32>
    %34 = vector.extract_strided_slice %27 {offsets = [6, 0], sizes = [1, 64], strides = [1, 1]} : vector<16x64xf32> to vector<1x64xf32>
    %35 = vector.extract_strided_slice %27 {offsets = [7, 0], sizes = [1, 64], strides = [1, 1]} : vector<16x64xf32> to vector<1x64xf32>
    %36 = vector.extract_strided_slice %27 {offsets = [8, 0], sizes = [1, 64], strides = [1, 1]} : vector<16x64xf32> to vector<1x64xf32>
    %c0_17 = arith.constant 0 : index
    %c0_18 = arith.constant 0 : index
    %c0_19 = arith.constant 0 : index
    %37 = vector.load %arg12[%c0_17, %c0_18, %c0_19] : memref<2x1x128xf32, #tpu.memory_space<vmem>>, vector<1x1x128xf32>
    %38 = vector.shape_cast %37 : vector<1x1x128xf32> to vector<1x128xf32>
    %39 = arith.truncf %25 : vector<16x64xf32> to vector<16x64xbf16>
    %c0_20 = arith.constant 0 : index
    %c0_21 = arith.constant 0 : index
    %c0_22 = arith.constant 0 : index
    %40 = vector.load %arg5[%c0_20, %c0_21, %c0_22] : memref<2x64x64xbf16, #tpu.memory_space<vmem>>, vector<1x64x64xbf16>
    %41 = vector.shape_cast %40 : vector<1x64x64xbf16> to vector<64x64xbf16>
    %cst_23 = arith.constant dense<0.000000e+00> : vector<16x64xf32>
    %42 = tpu.matmul %39, %41, %cst_23 {dimension_numbers = #tpu.dot_dimension_numbers<[1], [0], [0], [1], [0, 0, 1, 1], [], []>} : vector<16x64xbf16>, vector<64x64xbf16>, vector<16x64xf32> -> vector<16x64xf32>
    %43 = vector.broadcast %28 : vector<1x64xf32> to vector<16x64xf32>
    %44 = arith.addf %42, %43 : vector<16x64xf32>
    %c0_24 = arith.constant 0 : index
    %c0_25 = arith.constant 0 : index
    %c0_26 = arith.constant 0 : index
    %45 = vector.load %arg6[%c0_24, %c0_25, %c0_26] : memref<2x64x64xbf16, #tpu.memory_space<vmem>>, vector<1x64x64xbf16>
    %46 = vector.shape_cast %45 : vector<1x64x64xbf16> to vector<64x64xbf16>
    %cst_27 = arith.constant dense<0.000000e+00> : vector<16x64xf32>
    %47 = tpu.matmul %39, %46, %cst_27 {dimension_numbers = #tpu.dot_dimension_numbers<[1], [0], [0], [1], [0, 0, 1, 1], [], []>} : vector<16x64xbf16>, vector<64x64xbf16>, vector<16x64xf32> -> vector<16x64xf32>
    %48 = vector.broadcast %29 : vector<1x64xf32> to vector<16x64xf32>
    %49 = arith.addf %47, %48 : vector<16x64xf32>
    %c0_28 = arith.constant 0 : index
    %c0_29 = arith.constant 0 : index
    %c0_30 = arith.constant 0 : index
    %50 = vector.load %arg7[%c0_28, %c0_29, %c0_30] : memref<2x64x64xbf16, #tpu.memory_space<vmem>>, vector<1x64x64xbf16>
    %51 = vector.shape_cast %50 : vector<1x64x64xbf16> to vector<64x64xbf16>
    %cst_31 = arith.constant dense<0.000000e+00> : vector<16x64xf32>
    %52 = tpu.matmul %39, %51, %cst_31 {dimension_numbers = #tpu.dot_dimension_numbers<[1], [0], [0], [1], [0, 0, 1, 1], [], []>} : vector<16x64xbf16>, vector<64x64xbf16>, vector<16x64xf32> -> vector<16x64xf32>
    %53 = vector.broadcast %30 : vector<1x64xf32> to vector<16x64xf32>
    %54 = arith.addf %52, %53 : vector<16x64xf32>
    %55 = arith.truncf %44 : vector<16x64xf32> to vector<16x64xbf16>
    %56 = vector.shape_cast %55 : vector<16x64xbf16> to vector<1x16x64xbf16>
    %57 = arith.truncf %49 : vector<16x64xf32> to vector<16x64xbf16>
    %58 = arith.truncf %54 : vector<16x64xf32> to vector<16x64xbf16>
    %59 = vector.extract_strided_slice %24 {offsets = [0, 0], sizes = [1, 64], strides = [1, 1]} : vector<4x64xbf16> to vector<1x64xbf16>
    %60 = vector.broadcast %59 : vector<1x64xbf16> to vector<16x64xbf16>
    %61 = arith.mulf %57, %60 : vector<16x64xbf16>
    %62 = vector.shape_cast %61 : vector<16x64xbf16> to vector<1x16x64xbf16>
    %63 = vector.broadcast %59 : vector<1x64xbf16> to vector<16x64xbf16>
    %64 = arith.mulf %58, %63 : vector<16x64xbf16>
    %65 = vector.shape_cast %64 : vector<16x64xbf16> to vector<1x16x64xbf16>
    "tpu.trace_start"() <{level = 10 : i32, message = "gqd,gkd->gqk"}> : () -> ()
    %cst_32 = arith.constant dense<0.000000e+00> : vector<1x16x16xf32>
    %66 = tpu.matmul %56, %62, %cst_32 {dimension_numbers = #tpu.dot_dimension_numbers<[2], [2], [1], [1], [0, 0, 0, 1, 1, 1], [0], [0]>} : vector<1x16x64xbf16>, vector<1x16x64xbf16>, vector<1x16x16xf32> -> vector<1x16x16xf32>
    "tpu.trace_stop"() : () -> ()
    %cst_33 = arith.constant 2.500000e-01 : f32
    %67 = vector.broadcast %cst_33 : f32 to vector<1x16x16xf32>
    %68 = arith.mulf %66, %67 : vector<1x16x16xf32>
    %69 = arith.addf %68, %23 : vector<1x16x16xf32>
    %70 = vector.broadcast %21 : vector<1x1x16xf32> to vector<1x16x16xf32>
    %71 = arith.addf %69, %70 : vector<1x16x16xf32>
    %cst_34 = arith.constant dense<0xFF800000> : vector<1x16xf32>
    %72 = vector.multi_reduction <maximumf>, %71, %cst_34 [2] : vector<1x16x16xf32> to vector<1x16xf32>
    %73 = vector.shape_cast %72 : vector<1x16xf32> to vector<1x16x1xf32>
    %74 = vector.broadcast %73 : vector<1x16x1xf32> to vector<1x16x16xf32>
    %75 = arith.subf %71, %74 : vector<1x16x16xf32>
    %76 = math.exp %75 : vector<1x16x16xf32>
    %cst_35 = arith.constant dense<0.000000e+00> : vector<1x16xf32>
    %77 = vector.multi_reduction <add>, %76, %cst_35 [2] : vector<1x16x16xf32> to vector<1x16xf32>
    %78 = vector.shape_cast %77 : vector<1x16xf32> to vector<1x16x1xf32>
    %79 = vector.broadcast %78 : vector<1x16x1xf32> to vector<1x16x16xf32>
    %80 = arith.divf %76, %79 : vector<1x16x16xf32>
    %81 = arith.truncf %80 : vector<1x16x16xf32> to vector<1x16x16xbf16>
    "tpu.trace_start"() <{level = 10 : i32, message = "gqk,gkd->gqd"}> : () -> ()
    %cst_36 = arith.constant dense<0.000000e+00> : vector<1x16x64xf32>
    %82 = tpu.matmul %81, %65, %cst_36 {dimension_numbers = #tpu.dot_dimension_numbers<[2], [1], [1], [2], [0, 0, 0, 1, 1, 2], [0], [0]>} : vector<1x16x16xbf16>, vector<1x16x64xbf16>, vector<1x16x64xf32> -> vector<1x16x64xf32>
    "tpu.trace_stop"() : () -> ()
    %83 = vector.extract_strided_slice %24 {offsets = [1, 0], sizes = [1, 64], strides = [1, 1]} : vector<4x64xbf16> to vector<1x64xbf16>
    %84 = vector.broadcast %83 : vector<1x64xbf16> to vector<16x64xbf16>
    %85 = arith.mulf %57, %84 : vector<16x64xbf16>
    %86 = vector.shape_cast %85 : vector<16x64xbf16> to vector<1x16x64xbf16>
    %87 = vector.broadcast %83 : vector<1x64xbf16> to vector<16x64xbf16>
    %88 = arith.mulf %58, %87 : vector<16x64xbf16>
    %89 = vector.shape_cast %88 : vector<16x64xbf16> to vector<1x16x64xbf16>
    "tpu.trace_start"() <{level = 10 : i32, message = "gqd,gkd->gqk"}> : () -> ()
    %cst_37 = arith.constant dense<0.000000e+00> : vector<1x16x16xf32>
    %90 = tpu.matmul %56, %86, %cst_37 {dimension_numbers = #tpu.dot_dimension_numbers<[2], [2], [1], [1], [0, 0, 0, 1, 1, 1], [0], [0]>} : vector<1x16x64xbf16>, vector<1x16x64xbf16>, vector<1x16x16xf32> -> vector<1x16x16xf32>
    "tpu.trace_stop"() : () -> ()
    %cst_38 = arith.constant 2.500000e-01 : f32
    %91 = vector.broadcast %cst_38 : f32 to vector<1x16x16xf32>
    %92 = arith.mulf %90, %91 : vector<1x16x16xf32>
    %93 = arith.addf %92, %23 : vector<1x16x16xf32>
    %94 = vector.broadcast %21 : vector<1x1x16xf32> to vector<1x16x16xf32>
    %95 = arith.addf %93, %94 : vector<1x16x16xf32>
    %cst_39 = arith.constant dense<0xFF800000> : vector<1x16xf32>
    %96 = vector.multi_reduction <maximumf>, %95, %cst_39 [2] : vector<1x16x16xf32> to vector<1x16xf32>
    %97 = vector.shape_cast %96 : vector<1x16xf32> to vector<1x16x1xf32>
    %98 = vector.broadcast %97 : vector<1x16x1xf32> to vector<1x16x16xf32>
    %99 = arith.subf %95, %98 : vector<1x16x16xf32>
    %100 = math.exp %99 : vector<1x16x16xf32>
    %cst_40 = arith.constant dense<0.000000e+00> : vector<1x16xf32>
    %101 = vector.multi_reduction <add>, %100, %cst_40 [2] : vector<1x16x16xf32> to vector<1x16xf32>
    %102 = vector.shape_cast %101 : vector<1x16xf32> to vector<1x16x1xf32>
    %103 = vector.broadcast %102 : vector<1x16x1xf32> to vector<1x16x16xf32>
    %104 = arith.divf %100, %103 : vector<1x16x16xf32>
    %105 = arith.truncf %104 : vector<1x16x16xf32> to vector<1x16x16xbf16>
    "tpu.trace_start"() <{level = 10 : i32, message = "gqk,gkd->gqd"}> : () -> ()
    %cst_41 = arith.constant dense<0.000000e+00> : vector<1x16x64xf32>
    %106 = tpu.matmul %105, %89, %cst_41 {dimension_numbers = #tpu.dot_dimension_numbers<[2], [1], [1], [2], [0, 0, 0, 1, 1, 2], [0], [0]>} : vector<1x16x16xbf16>, vector<1x16x64xbf16>, vector<1x16x64xf32> -> vector<1x16x64xf32>
    "tpu.trace_stop"() : () -> ()
    %107 = arith.addf %82, %106 : vector<1x16x64xf32>
    %108 = vector.extract_strided_slice %24 {offsets = [2, 0], sizes = [1, 64], strides = [1, 1]} : vector<4x64xbf16> to vector<1x64xbf16>
    %109 = vector.broadcast %108 : vector<1x64xbf16> to vector<16x64xbf16>
    %110 = arith.mulf %57, %109 : vector<16x64xbf16>
    %111 = vector.shape_cast %110 : vector<16x64xbf16> to vector<1x16x64xbf16>
    %112 = vector.broadcast %108 : vector<1x64xbf16> to vector<16x64xbf16>
    %113 = arith.mulf %58, %112 : vector<16x64xbf16>
    %114 = vector.shape_cast %113 : vector<16x64xbf16> to vector<1x16x64xbf16>
    "tpu.trace_start"() <{level = 10 : i32, message = "gqd,gkd->gqk"}> : () -> ()
    %cst_42 = arith.constant dense<0.000000e+00> : vector<1x16x16xf32>
    %115 = tpu.matmul %56, %111, %cst_42 {dimension_numbers = #tpu.dot_dimension_numbers<[2], [2], [1], [1], [0, 0, 0, 1, 1, 1], [0], [0]>} : vector<1x16x64xbf16>, vector<1x16x64xbf16>, vector<1x16x16xf32> -> vector<1x16x16xf32>
    "tpu.trace_stop"() : () -> ()
    %cst_43 = arith.constant 2.500000e-01 : f32
    %116 = vector.broadcast %cst_43 : f32 to vector<1x16x16xf32>
    %117 = arith.mulf %115, %116 : vector<1x16x16xf32>
    %118 = arith.addf %117, %23 : vector<1x16x16xf32>
    %119 = vector.broadcast %21 : vector<1x1x16xf32> to vector<1x16x16xf32>
    %120 = arith.addf %118, %119 : vector<1x16x16xf32>
    %cst_44 = arith.constant dense<0xFF800000> : vector<1x16xf32>
    %121 = vector.multi_reduction <maximumf>, %120, %cst_44 [2] : vector<1x16x16xf32> to vector<1x16xf32>
    %122 = vector.shape_cast %121 : vector<1x16xf32> to vector<1x16x1xf32>
    %123 = vector.broadcast %122 : vector<1x16x1xf32> to vector<1x16x16xf32>
    %124 = arith.subf %120, %123 : vector<1x16x16xf32>
    %125 = math.exp %124 : vector<1x16x16xf32>
    %cst_45 = arith.constant dense<0.000000e+00> : vector<1x16xf32>
    %126 = vector.multi_reduction <add>, %125, %cst_45 [2] : vector<1x16x16xf32> to vector<1x16xf32>
    %127 = vector.shape_cast %126 : vector<1x16xf32> to vector<1x16x1xf32>
    %128 = vector.broadcast %127 : vector<1x16x1xf32> to vector<1x16x16xf32>
    %129 = arith.divf %125, %128 : vector<1x16x16xf32>
    %130 = arith.truncf %129 : vector<1x16x16xf32> to vector<1x16x16xbf16>
    "tpu.trace_start"() <{level = 10 : i32, message = "gqk,gkd->gqd"}> : () -> ()
    %cst_46 = arith.constant dense<0.000000e+00> : vector<1x16x64xf32>
    %131 = tpu.matmul %130, %114, %cst_46 {dimension_numbers = #tpu.dot_dimension_numbers<[2], [1], [1], [2], [0, 0, 0, 1, 1, 2], [0], [0]>} : vector<1x16x16xbf16>, vector<1x16x64xbf16>, vector<1x16x64xf32> -> vector<1x16x64xf32>
    "tpu.trace_stop"() : () -> ()
    %132 = arith.addf %107, %131 : vector<1x16x64xf32>
    %133 = vector.extract_strided_slice %24 {offsets = [3, 0], sizes = [1, 64], strides = [1, 1]} : vector<4x64xbf16> to vector<1x64xbf16>
    %134 = vector.broadcast %133 : vector<1x64xbf16> to vector<16x64xbf16>
    %135 = arith.mulf %57, %134 : vector<16x64xbf16>
    %136 = vector.shape_cast %135 : vector<16x64xbf16> to vector<1x16x64xbf16>
    %137 = vector.broadcast %133 : vector<1x64xbf16> to vector<16x64xbf16>
    %138 = arith.mulf %58, %137 : vector<16x64xbf16>
    %139 = vector.shape_cast %138 : vector<16x64xbf16> to vector<1x16x64xbf16>
    "tpu.trace_start"() <{level = 10 : i32, message = "gqd,gkd->gqk"}> : () -> ()
    %cst_47 = arith.constant dense<0.000000e+00> : vector<1x16x16xf32>
    %140 = tpu.matmul %56, %136, %cst_47 {dimension_numbers = #tpu.dot_dimension_numbers<[2], [2], [1], [1], [0, 0, 0, 1, 1, 1], [0], [0]>} : vector<1x16x64xbf16>, vector<1x16x64xbf16>, vector<1x16x16xf32> -> vector<1x16x16xf32>
    "tpu.trace_stop"() : () -> ()
    %cst_48 = arith.constant 2.500000e-01 : f32
    %141 = vector.broadcast %cst_48 : f32 to vector<1x16x16xf32>
    %142 = arith.mulf %140, %141 : vector<1x16x16xf32>
    %143 = arith.addf %142, %23 : vector<1x16x16xf32>
    %144 = vector.broadcast %21 : vector<1x1x16xf32> to vector<1x16x16xf32>
    %145 = arith.addf %143, %144 : vector<1x16x16xf32>
    %cst_49 = arith.constant dense<0xFF800000> : vector<1x16xf32>
    %146 = vector.multi_reduction <maximumf>, %145, %cst_49 [2] : vector<1x16x16xf32> to vector<1x16xf32>
    %147 = vector.shape_cast %146 : vector<1x16xf32> to vector<1x16x1xf32>
    %148 = vector.broadcast %147 : vector<1x16x1xf32> to vector<1x16x16xf32>
    %149 = arith.subf %145, %148 : vector<1x16x16xf32>
    %150 = math.exp %149 : vector<1x16x16xf32>
    %cst_50 = arith.constant dense<0.000000e+00> : vector<1x16xf32>
    %151 = vector.multi_reduction <add>, %150, %cst_50 [2] : vector<1x16x16xf32> to vector<1x16xf32>
    %152 = vector.shape_cast %151 : vector<1x16xf32> to vector<1x16x1xf32>
    %153 = vector.broadcast %152 : vector<1x16x1xf32> to vector<1x16x16xf32>
    %154 = arith.divf %150, %153 : vector<1x16x16xf32>
    %155 = arith.truncf %154 : vector<1x16x16xf32> to vector<1x16x16xbf16>
    "tpu.trace_start"() <{level = 10 : i32, message = "gqk,gkd->gqd"}> : () -> ()
    %cst_51 = arith.constant dense<0.000000e+00> : vector<1x16x64xf32>
    %156 = tpu.matmul %155, %139, %cst_51 {dimension_numbers = #tpu.dot_dimension_numbers<[2], [1], [1], [2], [0, 0, 0, 1, 1, 2], [0], [0]>} : vector<1x16x16xbf16>, vector<1x16x64xbf16>, vector<1x16x64xf32> -> vector<1x16x64xf32>
    "tpu.trace_stop"() : () -> ()
    %157 = arith.addf %132, %156 : vector<1x16x64xf32>
    %158 = vector.shape_cast %157 : vector<1x16x64xf32> to vector<16x64xf32>
    %159 = arith.truncf %158 : vector<16x64xf32> to vector<16x64xbf16>
    %c0_52 = arith.constant 0 : index
    %c0_53 = arith.constant 0 : index
    %c0_54 = arith.constant 0 : index
    %160 = vector.load %arg8[%c0_52, %c0_53, %c0_54] : memref<2x64x64xbf16, #tpu.memory_space<vmem>>, vector<1x64x64xbf16>
    %161 = vector.shape_cast %160 : vector<1x64x64xbf16> to vector<64x64xbf16>
    %cst_55 = arith.constant dense<0.000000e+00> : vector<16x64xf32>
    %162 = tpu.matmul %159, %161, %cst_55 {dimension_numbers = #tpu.dot_dimension_numbers<[1], [0], [0], [1], [0, 0, 1, 1], [], []>} : vector<16x64xbf16>, vector<64x64xbf16>, vector<16x64xf32> -> vector<16x64xf32>
    %163 = vector.broadcast %31 : vector<1x64xf32> to vector<16x64xf32>
    %164 = arith.addf %162, %163 : vector<16x64xf32>
    %165 = arith.addf %25, %164 : vector<16x64xf32>
    %cst_56 = arith.constant dense<0.000000e+00> : vector<16xf32>
    %166 = vector.multi_reduction <add>, %165, %cst_56 [1] : vector<16x64xf32> to vector<16xf32>
    %167 = vector.shape_cast %166 : vector<16xf32> to vector<16x1xf32>
    %168 = arith.mulf %165, %165 : vector<16x64xf32>
    %cst_57 = arith.constant dense<0.000000e+00> : vector<16xf32>
    %169 = vector.multi_reduction <add>, %168, %cst_57 [1] : vector<16x64xf32> to vector<16xf32>
    %170 = vector.shape_cast %169 : vector<16xf32> to vector<16x1xf32>
    %cst_58 = arith.constant 1.562500e-02 : f32
    %171 = vector.broadcast %cst_58 : f32 to vector<16x1xf32>
    %172 = arith.mulf %167, %171 : vector<16x1xf32>
    %cst_59 = arith.constant 1.562500e-02 : f32
    %173 = vector.broadcast %cst_59 : f32 to vector<16x1xf32>
    %174 = arith.mulf %170, %173 : vector<16x1xf32>
    %175 = arith.mulf %172, %172 : vector<16x1xf32>
    %176 = arith.subf %174, %175 : vector<16x1xf32>
    %cst_60 = arith.constant 0.000000e+00 : f32
    %177 = vector.broadcast %cst_60 : f32 to vector<16x1xf32>
    %178 = arith.maximumf %176, %177 : vector<16x1xf32>
    %179 = vector.broadcast %172 : vector<16x1xf32> to vector<16x64xf32>
    %180 = arith.subf %165, %179 : vector<16x64xf32>
    %cst_61 = arith.constant 9.99999974E-6 : f32
    %181 = vector.broadcast %cst_61 : f32 to vector<16x1xf32>
    %182 = arith.addf %178, %181 : vector<16x1xf32>
    %183 = math.rsqrt %182 : vector<16x1xf32>
    %184 = vector.broadcast %183 : vector<16x1xf32> to vector<16x64xf32>
    %185 = arith.mulf %180, %184 : vector<16x64xf32>
    %186 = vector.broadcast %32 : vector<1x64xf32> to vector<16x64xf32>
    %187 = arith.mulf %185, %186 : vector<16x64xf32>
    %188 = vector.broadcast %33 : vector<1x64xf32> to vector<16x64xf32>
    %189 = arith.addf %187, %188 : vector<16x64xf32>
    %190 = arith.truncf %189 : vector<16x64xf32> to vector<16x64xbf16>
    %c0_62 = arith.constant 0 : index
    %c0_63 = arith.constant 0 : index
    %c0_64 = arith.constant 0 : index
    %191 = vector.load %arg9[%c0_62, %c0_63, %c0_64] : memref<2x64x128xbf16, #tpu.memory_space<vmem>>, vector<1x64x128xbf16>
    %192 = vector.shape_cast %191 : vector<1x64x128xbf16> to vector<64x128xbf16>
    %cst_65 = arith.constant dense<0.000000e+00> : vector<16x128xf32>
    %193 = tpu.matmul %190, %192, %cst_65 {dimension_numbers = #tpu.dot_dimension_numbers<[1], [0], [0], [1], [0, 0, 1, 1], [], []>} : vector<16x64xbf16>, vector<64x128xbf16>, vector<16x128xf32> -> vector<16x128xf32>
    %194 = vector.broadcast %38 : vector<1x128xf32> to vector<16x128xf32>
    %195 = arith.addf %193, %194 : vector<16x128xf32>
    %cst_66 = arith.constant 0.000000e+00 : f32
    %196 = vector.broadcast %cst_66 : f32 to vector<16x128xf32>
    %197 = arith.maximumf %195, %196 : vector<16x128xf32>
    %198 = arith.truncf %197 : vector<16x128xf32> to vector<16x128xbf16>
    %c0_67 = arith.constant 0 : index
    %c0_68 = arith.constant 0 : index
    %c0_69 = arith.constant 0 : index
    %199 = vector.load %arg10[%c0_67, %c0_68, %c0_69] : memref<2x128x64xbf16, #tpu.memory_space<vmem>>, vector<1x128x64xbf16>
    %200 = vector.shape_cast %199 : vector<1x128x64xbf16> to vector<128x64xbf16>
    %cst_70 = arith.constant dense<0.000000e+00> : vector<16x64xf32>
    %201 = tpu.matmul %198, %200, %cst_70 {dimension_numbers = #tpu.dot_dimension_numbers<[1], [0], [0], [1], [0, 0, 1, 1], [], []>} : vector<16x128xbf16>, vector<128x64xbf16>, vector<16x64xf32> -> vector<16x64xf32>
    %202 = vector.broadcast %36 : vector<1x64xf32> to vector<16x64xf32>
    %203 = arith.addf %201, %202 : vector<16x64xf32>
    %204 = arith.addf %189, %203 : vector<16x64xf32>
    %cst_71 = arith.constant dense<0.000000e+00> : vector<16xf32>
    %205 = vector.multi_reduction <add>, %204, %cst_71 [1] : vector<16x64xf32> to vector<16xf32>
    %206 = vector.shape_cast %205 : vector<16xf32> to vector<16x1xf32>
    %207 = arith.mulf %204, %204 : vector<16x64xf32>
    %cst_72 = arith.constant dense<0.000000e+00> : vector<16xf32>
    %208 = vector.multi_reduction <add>, %207, %cst_72 [1] : vector<16x64xf32> to vector<16xf32>
    %209 = vector.shape_cast %208 : vector<16xf32> to vector<16x1xf32>
    %cst_73 = arith.constant 1.562500e-02 : f32
    %210 = vector.broadcast %cst_73 : f32 to vector<16x1xf32>
    %211 = arith.mulf %206, %210 : vector<16x1xf32>
    %cst_74 = arith.constant 1.562500e-02 : f32
    %212 = vector.broadcast %cst_74 : f32 to vector<16x1xf32>
    %213 = arith.mulf %209, %212 : vector<16x1xf32>
    %214 = arith.mulf %211, %211 : vector<16x1xf32>
    %215 = arith.subf %213, %214 : vector<16x1xf32>
    %cst_75 = arith.constant 0.000000e+00 : f32
    %216 = vector.broadcast %cst_75 : f32 to vector<16x1xf32>
    %217 = arith.maximumf %215, %216 : vector<16x1xf32>
    %218 = vector.broadcast %211 : vector<16x1xf32> to vector<16x64xf32>
    %219 = arith.subf %204, %218 : vector<16x64xf32>
    %cst_76 = arith.constant 9.99999974E-6 : f32
    %220 = vector.broadcast %cst_76 : f32 to vector<16x1xf32>
    %221 = arith.addf %217, %220 : vector<16x1xf32>
    %222 = math.rsqrt %221 : vector<16x1xf32>
    %223 = vector.broadcast %222 : vector<16x1xf32> to vector<16x64xf32>
    %224 = arith.mulf %219, %223 : vector<16x64xf32>
    %225 = vector.broadcast %34 : vector<1x64xf32> to vector<16x64xf32>
    %226 = arith.mulf %224, %225 : vector<16x64xf32>
    %227 = vector.broadcast %35 : vector<1x64xf32> to vector<16x64xf32>
    %228 = arith.addf %226, %227 : vector<16x64xf32>
    %c1 = arith.constant 1 : index
    %c0_77 = arith.constant 0 : index
    %c0_78 = arith.constant 0 : index
    %229 = vector.load %arg11[%c1, %c0_77, %c0_78] : memref<2x16x64xf32, #tpu.memory_space<vmem>>, vector<1x16x64xf32>
    %230 = vector.shape_cast %229 : vector<1x16x64xf32> to vector<16x64xf32>
    %231 = vector.extract_strided_slice %230 {offsets = [0, 0], sizes = [1, 64], strides = [1, 1]} : vector<16x64xf32> to vector<1x64xf32>
    %232 = vector.extract_strided_slice %230 {offsets = [1, 0], sizes = [1, 64], strides = [1, 1]} : vector<16x64xf32> to vector<1x64xf32>
    %233 = vector.extract_strided_slice %230 {offsets = [2, 0], sizes = [1, 64], strides = [1, 1]} : vector<16x64xf32> to vector<1x64xf32>
    %234 = vector.extract_strided_slice %230 {offsets = [3, 0], sizes = [1, 64], strides = [1, 1]} : vector<16x64xf32> to vector<1x64xf32>
    %235 = vector.extract_strided_slice %230 {offsets = [4, 0], sizes = [1, 64], strides = [1, 1]} : vector<16x64xf32> to vector<1x64xf32>
    %236 = vector.extract_strided_slice %230 {offsets = [5, 0], sizes = [1, 64], strides = [1, 1]} : vector<16x64xf32> to vector<1x64xf32>
    %237 = vector.extract_strided_slice %230 {offsets = [6, 0], sizes = [1, 64], strides = [1, 1]} : vector<16x64xf32> to vector<1x64xf32>
    %238 = vector.extract_strided_slice %230 {offsets = [7, 0], sizes = [1, 64], strides = [1, 1]} : vector<16x64xf32> to vector<1x64xf32>
    %239 = vector.extract_strided_slice %230 {offsets = [8, 0], sizes = [1, 64], strides = [1, 1]} : vector<16x64xf32> to vector<1x64xf32>
    %c1_79 = arith.constant 1 : index
    %c0_80 = arith.constant 0 : index
    %c0_81 = arith.constant 0 : index
    %240 = vector.load %arg12[%c1_79, %c0_80, %c0_81] : memref<2x1x128xf32, #tpu.memory_space<vmem>>, vector<1x1x128xf32>
    %241 = vector.shape_cast %240 : vector<1x1x128xf32> to vector<1x128xf32>
    %242 = arith.truncf %228 : vector<16x64xf32> to vector<16x64xbf16>
    %c1_82 = arith.constant 1 : index
    %c0_83 = arith.constant 0 : index
    %c0_84 = arith.constant 0 : index
    %243 = vector.load %arg5[%c1_82, %c0_83, %c0_84] : memref<2x64x64xbf16, #tpu.memory_space<vmem>>, vector<1x64x64xbf16>
    %244 = vector.shape_cast %243 : vector<1x64x64xbf16> to vector<64x64xbf16>
    %cst_85 = arith.constant dense<0.000000e+00> : vector<16x64xf32>
    %245 = tpu.matmul %242, %244, %cst_85 {dimension_numbers = #tpu.dot_dimension_numbers<[1], [0], [0], [1], [0, 0, 1, 1], [], []>} : vector<16x64xbf16>, vector<64x64xbf16>, vector<16x64xf32> -> vector<16x64xf32>
    %246 = vector.broadcast %231 : vector<1x64xf32> to vector<16x64xf32>
    %247 = arith.addf %245, %246 : vector<16x64xf32>
    %c1_86 = arith.constant 1 : index
    %c0_87 = arith.constant 0 : index
    %c0_88 = arith.constant 0 : index
    %248 = vector.load %arg6[%c1_86, %c0_87, %c0_88] : memref<2x64x64xbf16, #tpu.memory_space<vmem>>, vector<1x64x64xbf16>
    %249 = vector.shape_cast %248 : vector<1x64x64xbf16> to vector<64x64xbf16>
    %cst_89 = arith.constant dense<0.000000e+00> : vector<16x64xf32>
    %250 = tpu.matmul %242, %249, %cst_89 {dimension_numbers = #tpu.dot_dimension_numbers<[1], [0], [0], [1], [0, 0, 1, 1], [], []>} : vector<16x64xbf16>, vector<64x64xbf16>, vector<16x64xf32> -> vector<16x64xf32>
    %251 = vector.broadcast %232 : vector<1x64xf32> to vector<16x64xf32>
    %252 = arith.addf %250, %251 : vector<16x64xf32>
    %c1_90 = arith.constant 1 : index
    %c0_91 = arith.constant 0 : index
    %c0_92 = arith.constant 0 : index
    %253 = vector.load %arg7[%c1_90, %c0_91, %c0_92] : memref<2x64x64xbf16, #tpu.memory_space<vmem>>, vector<1x64x64xbf16>
    %254 = vector.shape_cast %253 : vector<1x64x64xbf16> to vector<64x64xbf16>
    %cst_93 = arith.constant dense<0.000000e+00> : vector<16x64xf32>
    %255 = tpu.matmul %242, %254, %cst_93 {dimension_numbers = #tpu.dot_dimension_numbers<[1], [0], [0], [1], [0, 0, 1, 1], [], []>} : vector<16x64xbf16>, vector<64x64xbf16>, vector<16x64xf32> -> vector<16x64xf32>
    %256 = vector.broadcast %233 : vector<1x64xf32> to vector<16x64xf32>
    %257 = arith.addf %255, %256 : vector<16x64xf32>
    %258 = arith.truncf %247 : vector<16x64xf32> to vector<16x64xbf16>
    %259 = vector.shape_cast %258 : vector<16x64xbf16> to vector<1x16x64xbf16>
    %260 = arith.truncf %252 : vector<16x64xf32> to vector<16x64xbf16>
    %261 = arith.truncf %257 : vector<16x64xf32> to vector<16x64xbf16>
    %262 = vector.extract_strided_slice %24 {offsets = [0, 0], sizes = [1, 64], strides = [1, 1]} : vector<4x64xbf16> to vector<1x64xbf16>
    %263 = vector.broadcast %262 : vector<1x64xbf16> to vector<16x64xbf16>
    %264 = arith.mulf %260, %263 : vector<16x64xbf16>
    %265 = vector.shape_cast %264 : vector<16x64xbf16> to vector<1x16x64xbf16>
    %266 = vector.broadcast %262 : vector<1x64xbf16> to vector<16x64xbf16>
    %267 = arith.mulf %261, %266 : vector<16x64xbf16>
    %268 = vector.shape_cast %267 : vector<16x64xbf16> to vector<1x16x64xbf16>
    "tpu.trace_start"() <{level = 10 : i32, message = "gqd,gkd->gqk"}> : () -> ()
    %cst_94 = arith.constant dense<0.000000e+00> : vector<1x16x16xf32>
    %269 = tpu.matmul %259, %265, %cst_94 {dimension_numbers = #tpu.dot_dimension_numbers<[2], [2], [1], [1], [0, 0, 0, 1, 1, 1], [0], [0]>} : vector<1x16x64xbf16>, vector<1x16x64xbf16>, vector<1x16x16xf32> -> vector<1x16x16xf32>
    "tpu.trace_stop"() : () -> ()
    %cst_95 = arith.constant 2.500000e-01 : f32
    %270 = vector.broadcast %cst_95 : f32 to vector<1x16x16xf32>
    %271 = arith.mulf %269, %270 : vector<1x16x16xf32>
    %272 = arith.addf %271, %23 : vector<1x16x16xf32>
    %273 = vector.broadcast %21 : vector<1x1x16xf32> to vector<1x16x16xf32>
    %274 = arith.addf %272, %273 : vector<1x16x16xf32>
    %cst_96 = arith.constant dense<0xFF800000> : vector<1x16xf32>
    %275 = vector.multi_reduction <maximumf>, %274, %cst_96 [2] : vector<1x16x16xf32> to vector<1x16xf32>
    %276 = vector.shape_cast %275 : vector<1x16xf32> to vector<1x16x1xf32>
    %277 = vector.broadcast %276 : vector<1x16x1xf32> to vector<1x16x16xf32>
    %278 = arith.subf %274, %277 : vector<1x16x16xf32>
    %279 = math.exp %278 : vector<1x16x16xf32>
    %cst_97 = arith.constant dense<0.000000e+00> : vector<1x16xf32>
    %280 = vector.multi_reduction <add>, %279, %cst_97 [2] : vector<1x16x16xf32> to vector<1x16xf32>
    %281 = vector.shape_cast %280 : vector<1x16xf32> to vector<1x16x1xf32>
    %282 = vector.broadcast %281 : vector<1x16x1xf32> to vector<1x16x16xf32>
    %283 = arith.divf %279, %282 : vector<1x16x16xf32>
    %284 = arith.truncf %283 : vector<1x16x16xf32> to vector<1x16x16xbf16>
    "tpu.trace_start"() <{level = 10 : i32, message = "gqk,gkd->gqd"}> : () -> ()
    %cst_98 = arith.constant dense<0.000000e+00> : vector<1x16x64xf32>
    %285 = tpu.matmul %284, %268, %cst_98 {dimension_numbers = #tpu.dot_dimension_numbers<[2], [1], [1], [2], [0, 0, 0, 1, 1, 2], [0], [0]>} : vector<1x16x16xbf16>, vector<1x16x64xbf16>, vector<1x16x64xf32> -> vector<1x16x64xf32>
    "tpu.trace_stop"() : () -> ()
    %286 = vector.extract_strided_slice %24 {offsets = [1, 0], sizes = [1, 64], strides = [1, 1]} : vector<4x64xbf16> to vector<1x64xbf16>
    %287 = vector.broadcast %286 : vector<1x64xbf16> to vector<16x64xbf16>
    %288 = arith.mulf %260, %287 : vector<16x64xbf16>
    %289 = vector.shape_cast %288 : vector<16x64xbf16> to vector<1x16x64xbf16>
    %290 = vector.broadcast %286 : vector<1x64xbf16> to vector<16x64xbf16>
    %291 = arith.mulf %261, %290 : vector<16x64xbf16>
    %292 = vector.shape_cast %291 : vector<16x64xbf16> to vector<1x16x64xbf16>
    "tpu.trace_start"() <{level = 10 : i32, message = "gqd,gkd->gqk"}> : () -> ()
    %cst_99 = arith.constant dense<0.000000e+00> : vector<1x16x16xf32>
    %293 = tpu.matmul %259, %289, %cst_99 {dimension_numbers = #tpu.dot_dimension_numbers<[2], [2], [1], [1], [0, 0, 0, 1, 1, 1], [0], [0]>} : vector<1x16x64xbf16>, vector<1x16x64xbf16>, vector<1x16x16xf32> -> vector<1x16x16xf32>
    "tpu.trace_stop"() : () -> ()
    %cst_100 = arith.constant 2.500000e-01 : f32
    %294 = vector.broadcast %cst_100 : f32 to vector<1x16x16xf32>
    %295 = arith.mulf %293, %294 : vector<1x16x16xf32>
    %296 = arith.addf %295, %23 : vector<1x16x16xf32>
    %297 = vector.broadcast %21 : vector<1x1x16xf32> to vector<1x16x16xf32>
    %298 = arith.addf %296, %297 : vector<1x16x16xf32>
    %cst_101 = arith.constant dense<0xFF800000> : vector<1x16xf32>
    %299 = vector.multi_reduction <maximumf>, %298, %cst_101 [2] : vector<1x16x16xf32> to vector<1x16xf32>
    %300 = vector.shape_cast %299 : vector<1x16xf32> to vector<1x16x1xf32>
    %301 = vector.broadcast %300 : vector<1x16x1xf32> to vector<1x16x16xf32>
    %302 = arith.subf %298, %301 : vector<1x16x16xf32>
    %303 = math.exp %302 : vector<1x16x16xf32>
    %cst_102 = arith.constant dense<0.000000e+00> : vector<1x16xf32>
    %304 = vector.multi_reduction <add>, %303, %cst_102 [2] : vector<1x16x16xf32> to vector<1x16xf32>
    %305 = vector.shape_cast %304 : vector<1x16xf32> to vector<1x16x1xf32>
    %306 = vector.broadcast %305 : vector<1x16x1xf32> to vector<1x16x16xf32>
    %307 = arith.divf %303, %306 : vector<1x16x16xf32>
    %308 = arith.truncf %307 : vector<1x16x16xf32> to vector<1x16x16xbf16>
    "tpu.trace_start"() <{level = 10 : i32, message = "gqk,gkd->gqd"}> : () -> ()
    %cst_103 = arith.constant dense<0.000000e+00> : vector<1x16x64xf32>
    %309 = tpu.matmul %308, %292, %cst_103 {dimension_numbers = #tpu.dot_dimension_numbers<[2], [1], [1], [2], [0, 0, 0, 1, 1, 2], [0], [0]>} : vector<1x16x16xbf16>, vector<1x16x64xbf16>, vector<1x16x64xf32> -> vector<1x16x64xf32>
    "tpu.trace_stop"() : () -> ()
    %310 = arith.addf %285, %309 : vector<1x16x64xf32>
    %311 = vector.extract_strided_slice %24 {offsets = [2, 0], sizes = [1, 64], strides = [1, 1]} : vector<4x64xbf16> to vector<1x64xbf16>
    %312 = vector.broadcast %311 : vector<1x64xbf16> to vector<16x64xbf16>
    %313 = arith.mulf %260, %312 : vector<16x64xbf16>
    %314 = vector.shape_cast %313 : vector<16x64xbf16> to vector<1x16x64xbf16>
    %315 = vector.broadcast %311 : vector<1x64xbf16> to vector<16x64xbf16>
    %316 = arith.mulf %261, %315 : vector<16x64xbf16>
    %317 = vector.shape_cast %316 : vector<16x64xbf16> to vector<1x16x64xbf16>
    "tpu.trace_start"() <{level = 10 : i32, message = "gqd,gkd->gqk"}> : () -> ()
    %cst_104 = arith.constant dense<0.000000e+00> : vector<1x16x16xf32>
    %318 = tpu.matmul %259, %314, %cst_104 {dimension_numbers = #tpu.dot_dimension_numbers<[2], [2], [1], [1], [0, 0, 0, 1, 1, 1], [0], [0]>} : vector<1x16x64xbf16>, vector<1x16x64xbf16>, vector<1x16x16xf32> -> vector<1x16x16xf32>
    "tpu.trace_stop"() : () -> ()
    %cst_105 = arith.constant 2.500000e-01 : f32
    %319 = vector.broadcast %cst_105 : f32 to vector<1x16x16xf32>
    %320 = arith.mulf %318, %319 : vector<1x16x16xf32>
    %321 = arith.addf %320, %23 : vector<1x16x16xf32>
    %322 = vector.broadcast %21 : vector<1x1x16xf32> to vector<1x16x16xf32>
    %323 = arith.addf %321, %322 : vector<1x16x16xf32>
    %cst_106 = arith.constant dense<0xFF800000> : vector<1x16xf32>
    %324 = vector.multi_reduction <maximumf>, %323, %cst_106 [2] : vector<1x16x16xf32> to vector<1x16xf32>
    %325 = vector.shape_cast %324 : vector<1x16xf32> to vector<1x16x1xf32>
    %326 = vector.broadcast %325 : vector<1x16x1xf32> to vector<1x16x16xf32>
    %327 = arith.subf %323, %326 : vector<1x16x16xf32>
    %328 = math.exp %327 : vector<1x16x16xf32>
    %cst_107 = arith.constant dense<0.000000e+00> : vector<1x16xf32>
    %329 = vector.multi_reduction <add>, %328, %cst_107 [2] : vector<1x16x16xf32> to vector<1x16xf32>
    %330 = vector.shape_cast %329 : vector<1x16xf32> to vector<1x16x1xf32>
    %331 = vector.broadcast %330 : vector<1x16x1xf32> to vector<1x16x16xf32>
    %332 = arith.divf %328, %331 : vector<1x16x16xf32>
    %333 = arith.truncf %332 : vector<1x16x16xf32> to vector<1x16x16xbf16>
    "tpu.trace_start"() <{level = 10 : i32, message = "gqk,gkd->gqd"}> : () -> ()
    %cst_108 = arith.constant dense<0.000000e+00> : vector<1x16x64xf32>
    %334 = tpu.matmul %333, %317, %cst_108 {dimension_numbers = #tpu.dot_dimension_numbers<[2], [1], [1], [2], [0, 0, 0, 1, 1, 2], [0], [0]>} : vector<1x16x16xbf16>, vector<1x16x64xbf16>, vector<1x16x64xf32> -> vector<1x16x64xf32>
    "tpu.trace_stop"() : () -> ()
    %335 = arith.addf %310, %334 : vector<1x16x64xf32>
    %336 = vector.extract_strided_slice %24 {offsets = [3, 0], sizes = [1, 64], strides = [1, 1]} : vector<4x64xbf16> to vector<1x64xbf16>
    %337 = vector.broadcast %336 : vector<1x64xbf16> to vector<16x64xbf16>
    %338 = arith.mulf %260, %337 : vector<16x64xbf16>
    %339 = vector.shape_cast %338 : vector<16x64xbf16> to vector<1x16x64xbf16>
    %340 = vector.broadcast %336 : vector<1x64xbf16> to vector<16x64xbf16>
    %341 = arith.mulf %261, %340 : vector<16x64xbf16>
    %342 = vector.shape_cast %341 : vector<16x64xbf16> to vector<1x16x64xbf16>
    "tpu.trace_start"() <{level = 10 : i32, message = "gqd,gkd->gqk"}> : () -> ()
    %cst_109 = arith.constant dense<0.000000e+00> : vector<1x16x16xf32>
    %343 = tpu.matmul %259, %339, %cst_109 {dimension_numbers = #tpu.dot_dimension_numbers<[2], [2], [1], [1], [0, 0, 0, 1, 1, 1], [0], [0]>} : vector<1x16x64xbf16>, vector<1x16x64xbf16>, vector<1x16x16xf32> -> vector<1x16x16xf32>
    "tpu.trace_stop"() : () -> ()
    %cst_110 = arith.constant 2.500000e-01 : f32
    %344 = vector.broadcast %cst_110 : f32 to vector<1x16x16xf32>
    %345 = arith.mulf %343, %344 : vector<1x16x16xf32>
    %346 = arith.addf %345, %23 : vector<1x16x16xf32>
    %347 = vector.broadcast %21 : vector<1x1x16xf32> to vector<1x16x16xf32>
    %348 = arith.addf %346, %347 : vector<1x16x16xf32>
    %cst_111 = arith.constant dense<0xFF800000> : vector<1x16xf32>
    %349 = vector.multi_reduction <maximumf>, %348, %cst_111 [2] : vector<1x16x16xf32> to vector<1x16xf32>
    %350 = vector.shape_cast %349 : vector<1x16xf32> to vector<1x16x1xf32>
    %351 = vector.broadcast %350 : vector<1x16x1xf32> to vector<1x16x16xf32>
    %352 = arith.subf %348, %351 : vector<1x16x16xf32>
    %353 = math.exp %352 : vector<1x16x16xf32>
    %cst_112 = arith.constant dense<0.000000e+00> : vector<1x16xf32>
    %354 = vector.multi_reduction <add>, %353, %cst_112 [2] : vector<1x16x16xf32> to vector<1x16xf32>
    %355 = vector.shape_cast %354 : vector<1x16xf32> to vector<1x16x1xf32>
    %356 = vector.broadcast %355 : vector<1x16x1xf32> to vector<1x16x16xf32>
    %357 = arith.divf %353, %356 : vector<1x16x16xf32>
    %358 = arith.truncf %357 : vector<1x16x16xf32> to vector<1x16x16xbf16>
    "tpu.trace_start"() <{level = 10 : i32, message = "gqk,gkd->gqd"}> : () -> ()
    %cst_113 = arith.constant dense<0.000000e+00> : vector<1x16x64xf32>
    %359 = tpu.matmul %358, %342, %cst_113 {dimension_numbers = #tpu.dot_dimension_numbers<[2], [1], [1], [2], [0, 0, 0, 1, 1, 2], [0], [0]>} : vector<1x16x16xbf16>, vector<1x16x64xbf16>, vector<1x16x64xf32> -> vector<1x16x64xf32>
    "tpu.trace_stop"() : () -> ()
    %360 = arith.addf %335, %359 : vector<1x16x64xf32>
    %361 = vector.shape_cast %360 : vector<1x16x64xf32> to vector<16x64xf32>
    %362 = arith.truncf %361 : vector<16x64xf32> to vector<16x64xbf16>
    %c1_114 = arith.constant 1 : index
    %c0_115 = arith.constant 0 : index
    %c0_116 = arith.constant 0 : index
    %363 = vector.load %arg8[%c1_114, %c0_115, %c0_116] : memref<2x64x64xbf16, #tpu.memory_space<vmem>>, vector<1x64x64xbf16>
    %364 = vector.shape_cast %363 : vector<1x64x64xbf16> to vector<64x64xbf16>
    %cst_117 = arith.constant dense<0.000000e+00> : vector<16x64xf32>
    %365 = tpu.matmul %362, %364, %cst_117 {dimension_numbers = #tpu.dot_dimension_numbers<[1], [0], [0], [1], [0, 0, 1, 1], [], []>} : vector<16x64xbf16>, vector<64x64xbf16>, vector<16x64xf32> -> vector<16x64xf32>
    %366 = vector.broadcast %234 : vector<1x64xf32> to vector<16x64xf32>
    %367 = arith.addf %365, %366 : vector<16x64xf32>
    %368 = arith.addf %228, %367 : vector<16x64xf32>
    %cst_118 = arith.constant dense<0.000000e+00> : vector<16xf32>
    %369 = vector.multi_reduction <add>, %368, %cst_118 [1] : vector<16x64xf32> to vector<16xf32>
    %370 = vector.shape_cast %369 : vector<16xf32> to vector<16x1xf32>
    %371 = arith.mulf %368, %368 : vector<16x64xf32>
    %cst_119 = arith.constant dense<0.000000e+00> : vector<16xf32>
    %372 = vector.multi_reduction <add>, %371, %cst_119 [1] : vector<16x64xf32> to vector<16xf32>
    %373 = vector.shape_cast %372 : vector<16xf32> to vector<16x1xf32>
    %cst_120 = arith.constant 1.562500e-02 : f32
    %374 = vector.broadcast %cst_120 : f32 to vector<16x1xf32>
    %375 = arith.mulf %370, %374 : vector<16x1xf32>
    %cst_121 = arith.constant 1.562500e-02 : f32
    %376 = vector.broadcast %cst_121 : f32 to vector<16x1xf32>
    %377 = arith.mulf %373, %376 : vector<16x1xf32>
    %378 = arith.mulf %375, %375 : vector<16x1xf32>
    %379 = arith.subf %377, %378 : vector<16x1xf32>
    %cst_122 = arith.constant 0.000000e+00 : f32
    %380 = vector.broadcast %cst_122 : f32 to vector<16x1xf32>
    %381 = arith.maximumf %379, %380 : vector<16x1xf32>
    %382 = vector.broadcast %375 : vector<16x1xf32> to vector<16x64xf32>
    %383 = arith.subf %368, %382 : vector<16x64xf32>
    %cst_123 = arith.constant 9.99999974E-6 : f32
    %384 = vector.broadcast %cst_123 : f32 to vector<16x1xf32>
    %385 = arith.addf %381, %384 : vector<16x1xf32>
    %386 = math.rsqrt %385 : vector<16x1xf32>
    %387 = vector.broadcast %386 : vector<16x1xf32> to vector<16x64xf32>
    %388 = arith.mulf %383, %387 : vector<16x64xf32>
    %389 = vector.broadcast %235 : vector<1x64xf32> to vector<16x64xf32>
    %390 = arith.mulf %388, %389 : vector<16x64xf32>
    %391 = vector.broadcast %236 : vector<1x64xf32> to vector<16x64xf32>
    %392 = arith.addf %390, %391 : vector<16x64xf32>
    %393 = arith.truncf %392 : vector<16x64xf32> to vector<16x64xbf16>
    %c1_124 = arith.constant 1 : index
    %c0_125 = arith.constant 0 : index
    %c0_126 = arith.constant 0 : index
    %394 = vector.load %arg9[%c1_124, %c0_125, %c0_126] : memref<2x64x128xbf16, #tpu.memory_space<vmem>>, vector<1x64x128xbf16>
    %395 = vector.shape_cast %394 : vector<1x64x128xbf16> to vector<64x128xbf16>
    %cst_127 = arith.constant dense<0.000000e+00> : vector<16x128xf32>
    %396 = tpu.matmul %393, %395, %cst_127 {dimension_numbers = #tpu.dot_dimension_numbers<[1], [0], [0], [1], [0, 0, 1, 1], [], []>} : vector<16x64xbf16>, vector<64x128xbf16>, vector<16x128xf32> -> vector<16x128xf32>
    %397 = vector.broadcast %241 : vector<1x128xf32> to vector<16x128xf32>
    %398 = arith.addf %396, %397 : vector<16x128xf32>
    %cst_128 = arith.constant 0.000000e+00 : f32
    %399 = vector.broadcast %cst_128 : f32 to vector<16x128xf32>
    %400 = arith.maximumf %398, %399 : vector<16x128xf32>
    %401 = arith.truncf %400 : vector<16x128xf32> to vector<16x128xbf16>
    %c1_129 = arith.constant 1 : index
    %c0_130 = arith.constant 0 : index
    %c0_131 = arith.constant 0 : index
    %402 = vector.load %arg10[%c1_129, %c0_130, %c0_131] : memref<2x128x64xbf16, #tpu.memory_space<vmem>>, vector<1x128x64xbf16>
    %403 = vector.shape_cast %402 : vector<1x128x64xbf16> to vector<128x64xbf16>
    %cst_132 = arith.constant dense<0.000000e+00> : vector<16x64xf32>
    %404 = tpu.matmul %401, %403, %cst_132 {dimension_numbers = #tpu.dot_dimension_numbers<[1], [0], [0], [1], [0, 0, 1, 1], [], []>} : vector<16x128xbf16>, vector<128x64xbf16>, vector<16x64xf32> -> vector<16x64xf32>
    %405 = vector.broadcast %239 : vector<1x64xf32> to vector<16x64xf32>
    %406 = arith.addf %404, %405 : vector<16x64xf32>
    %407 = arith.addf %392, %406 : vector<16x64xf32>
    %cst_133 = arith.constant dense<0.000000e+00> : vector<16xf32>
    %408 = vector.multi_reduction <add>, %407, %cst_133 [1] : vector<16x64xf32> to vector<16xf32>
    %409 = vector.shape_cast %408 : vector<16xf32> to vector<16x1xf32>
    %410 = arith.mulf %407, %407 : vector<16x64xf32>
    %cst_134 = arith.constant dense<0.000000e+00> : vector<16xf32>
    %411 = vector.multi_reduction <add>, %410, %cst_134 [1] : vector<16x64xf32> to vector<16xf32>
    %412 = vector.shape_cast %411 : vector<16xf32> to vector<16x1xf32>
    %cst_135 = arith.constant 1.562500e-02 : f32
    %413 = vector.broadcast %cst_135 : f32 to vector<16x1xf32>
    %414 = arith.mulf %409, %413 : vector<16x1xf32>
    %cst_136 = arith.constant 1.562500e-02 : f32
    %415 = vector.broadcast %cst_136 : f32 to vector<16x1xf32>
    %416 = arith.mulf %412, %415 : vector<16x1xf32>
    %417 = arith.mulf %414, %414 : vector<16x1xf32>
    %418 = arith.subf %416, %417 : vector<16x1xf32>
    %cst_137 = arith.constant 0.000000e+00 : f32
    %419 = vector.broadcast %cst_137 : f32 to vector<16x1xf32>
    %420 = arith.maximumf %418, %419 : vector<16x1xf32>
    %421 = vector.broadcast %414 : vector<16x1xf32> to vector<16x64xf32>
    %422 = arith.subf %407, %421 : vector<16x64xf32>
    %cst_138 = arith.constant 9.99999974E-6 : f32
    %423 = vector.broadcast %cst_138 : f32 to vector<16x1xf32>
    %424 = arith.addf %420, %423 : vector<16x1xf32>
    %425 = math.rsqrt %424 : vector<16x1xf32>
    %426 = vector.broadcast %425 : vector<16x1xf32> to vector<16x64xf32>
    %427 = arith.mulf %422, %426 : vector<16x64xf32>
    %428 = vector.broadcast %237 : vector<1x64xf32> to vector<16x64xf32>
    %429 = arith.mulf %427, %428 : vector<16x64xf32>
    %430 = vector.broadcast %238 : vector<1x64xf32> to vector<16x64xf32>
    %431 = arith.addf %429, %430 : vector<16x64xf32>
    %432 = vector.shape_cast %431 : vector<16x64xf32> to vector<2x8x64xf32>
    %cst_139 = arith.constant dense<0.000000e+00> : vector<2xf32>
    %433 = vector.multi_reduction <add>, %10, %cst_139 [1] : vector<2x8xf32> to vector<2xf32>
    %434 = vector.shape_cast %433 : vector<2xf32> to vector<2x1xf32>
    %cst_140 = arith.constant 1.000000e+00 : f32
    %435 = vector.broadcast %cst_140 : f32 to vector<2x1xf32>
    %436 = arith.maximumf %434, %435 : vector<2x1xf32>
    %437 = vector.shape_cast %10 : vector<2x8xf32> to vector<2x8x1xf32>
    %438 = vector.broadcast %437 : vector<2x8x1xf32> to vector<2x8x64xf32>
    %439 = arith.mulf %432, %438 : vector<2x8x64xf32>
    %cst_141 = arith.constant dense<0.000000e+00> : vector<2x64xf32>
    %440 = vector.multi_reduction <add>, %439, %cst_141 [1] : vector<2x8x64xf32> to vector<2x64xf32>
    %441 = vector.broadcast %436 : vector<2x1xf32> to vector<2x64xf32>
    %442 = arith.divf %440, %441 : vector<2x64xf32>
    %443 = vector.extract_strided_slice %442 {offsets = [0, 0], sizes = [1, 64], strides = [1, 1]} : vector<2x64xf32> to vector<1x64xf32>
    %444 = vector.extract_strided_slice %442 {offsets = [1, 0], sizes = [1, 64], strides = [1, 1]} : vector<2x64xf32> to vector<1x64xf32>
    %445 = tpu.concatenate %443, %444 in 1 : vector<1x64xf32>, vector<1x64xf32> -> vector<1x128xf32>
    %c0_142 = arith.constant 0 : index
    %c0_143 = arith.constant 0 : index
    %c0_144 = arith.constant 0 : index
    %446 = vector.load %arg13[%c0_142, %c0_143, %c0_144] : memref<1x1x128xf32, #tpu.memory_space<vmem>>, vector<1x1x128xf32>
    %447 = vector.shape_cast %446 : vector<1x1x128xf32> to vector<1x128xf32>
    %448 = vector.shape_cast %445 : vector<1x128xf32> to vector<1x1x128xf32>
    tpu.vector_store %arg13[%c0_142, %c0_143, %c0_144], %448 {strides = array<i32>} : memref<1x1x128xf32, #tpu.memory_space<vmem>>, vector<1x1x128xf32>,
    return
  }
  func.func @transform_0(%arg0: i32) -> (i32, i32, i32, i32) {
    %c0_i32 = arith.constant 0 : i32
    %c0_i32_0 = arith.constant 0 : i32
    %c0_i32_1 = arith.constant 0 : i32
    %c0_i32_2 = arith.constant 0 : i32
    return %arg0, %c0_i32, %c0_i32_0, %c0_i32_1 : i32, i32, i32, i32
  }
  func.func @transform_1(%arg0: i32) -> (i32, i32) {
    %c0_i32 = arith.constant 0 : i32
    %c0_i32_0 = arith.constant 0 : i32
    %c0_i32_1 = arith.constant 0 : i32
    return %c0_i32, %c0_i32_0 : i32, i32
  }
  func.func @transform_2(%arg0: i32) -> (i32, i32) {
    %c0_i32 = arith.constant 0 : i32
    %c0_i32_0 = arith.constant 0 : i32
    %c0_i32_1 = arith.constant 0 : i32
    return %c0_i32, %c0_i32_0 : i32, i32
  }
  func.func @transform_3(%arg0: i32) -> (i32, i32) {
    %c0_i32 = arith.constant 0 : i32
    %c0_i32_0 = arith.constant 0 : i32
    %c0_i32_1 = arith.constant 0 : i32
    return %c0_i32, %c0_i32_0 : i32, i32
  }
  func.func @transform_4(%arg0: i32) -> (i32, i32, i32) {
    %c0_i32 = arith.constant 0 : i32
    %c0_i32_0 = arith.constant 0 : i32
    %c0_i32_1 = arith.constant 0 : i32
    %c0_i32_2 = arith.constant 0 : i32
    return %c0_i32, %c0_i32_0, %c0_i32_1 : i32, i32, i32
  }
  func.func @transform_5(%arg0: i32) -> (i32, i32, i32) {
    %c0_i32 = arith.constant 0 : i32
    %c0_i32_0 = arith.constant 0 : i32
    %c0_i32_1 = arith.constant 0 : i32
    %c0_i32_2 = arith.constant 0 : i32
    return %c0_i32, %c0_i32_0, %c0_i32_1 : i32, i32, i32
  }
  func.func @transform_6(%arg0: i32) -> (i32, i32, i32) {
    %c0_i32 = arith.constant 0 : i32
    %c0_i32_0 = arith.constant 0 : i32
    %c0_i32_1 = arith.constant 0 : i32
    %c0_i32_2 = arith.constant 0 : i32
    return %c0_i32, %c0_i32_0, %c0_i32_1 : i32, i32, i32
  }
  func.func @transform_7(%arg0: i32) -> (i32, i32, i32) {
    %c0_i32 = arith.constant 0 : i32
    %c0_i32_0 = arith.constant 0 : i32
    %c0_i32_1 = arith.constant 0 : i32
    %c0_i32_2 = arith.constant 0 : i32
    return %c0_i32, %c0_i32_0, %c0_i32_1 : i32, i32, i32
  }
  func.func @transform_8(%arg0: i32) -> (i32, i32, i32) {
    %c0_i32 = arith.constant 0 : i32
    %c0_i32_0 = arith.constant 0 : i32
    %c0_i32_1 = arith.constant 0 : i32
    %c0_i32_2 = arith.constant 0 : i32
    return %c0_i32, %c0_i32_0, %c0_i32_1 : i32, i32, i32
  }
  func.func @transform_9(%arg0: i32) -> (i32, i32, i32) {
    %c0_i32 = arith.constant 0 : i32
    %c0_i32_0 = arith.constant 0 : i32
    %c0_i32_1 = arith.constant 0 : i32
    %c0_i32_2 = arith.constant 0 : i32
    return %c0_i32, %c0_i32_0, %c0_i32_1 : i32, i32, i32
  }
  func.func @transform_10(%arg0: i32) -> (i32, i32, i32) {
    %c0_i32 = arith.constant 0 : i32
    %c0_i32_0 = arith.constant 0 : i32
    %c0_i32_1 = arith.constant 0 : i32
    %c0_i32_2 = arith.constant 0 : i32
    return %c0_i32, %c0_i32_0, %c0_i32_1 : i32, i32, i32
  }
  func.func @transform_11(%arg0: i32) -> (i32, i32, i32) {
    %c0_i32 = arith.constant 0 : i32
    %c0_i32_0 = arith.constant 0 : i32
    %c0_i32_1 = arith.constant 0 : i32
    %c0_i32_2 = arith.constant 0 : i32
    return %c0_i32, %c0_i32_0, %c0_i32_1 : i32, i32, i32
  }
  func.func @transform_12(%arg0: i32) -> (i32, i32, i32) {
    %c0_i32 = arith.constant 0 : i32
    %c0_i32_0 = arith.constant 0 : i32
    %c0_i32_1 = arith.constant 0 : i32
    return %arg0, %c0_i32, %c0_i32_0 : i32, i32, i32
  }
}

</mosaic_0001>

<llo_original>
// kernel: simple_transformer.1
$region0: #{simple_transformer.1}
  #allocation0 [shape = 'u32[]', space=smem, size = 0x4, offset = 0x4, fixed_abs, tag = 'smem constant byte address 0x4 - core index']
  #allocation1 [shape = 'u32[72,128]{1,0:T(1,128)}', space=vmem, size = 0x9000, scoped, tag = 'internal scratch']
  %s0 = inlined_call_operand.vmem [shape: f32[1,2,8,64], index: 0, kind: input, shape index: {}]
  %s1 = inlined_call_operand.vmem [shape: f32[8,64], index: 1, kind: input, shape index: {}]
  %s2 = inlined_call_operand.vmem [shape: f32[16,16], index: 2, kind: input, shape index: {}]
  %s3 = inlined_call_operand.vmem [shape: bf16[4,64], index: 3, kind: input, shape index: {}]
  %s4 = inlined_call_operand.vmem [shape: bf16[2,64,64], index: 4, kind: input, shape index: {}]
  %s5 = inlined_call_operand.vmem [shape: bf16[2,64,64], index: 5, kind: input, shape index: {}]
  %s6 = inlined_call_operand.vmem [shape: bf16[2,64,64], index: 6, kind: input, shape index: {}]
  %s7 = inlined_call_operand.vmem [shape: bf16[2,64,64], index: 7, kind: input, shape index: {}]
  %s8 = inlined_call_operand.hbm [shape: bf16[2,64,128], index: 8, kind: input, shape index: {}]
  %s9 = inlined_call_operand.vmem [shape: bf16[2,128,64], index: 9, kind: input, shape index: {}]
  %s10 = inlined_call_operand.vmem [shape: f32[2,16,64], index: 10, kind: input, shape index: {}]
  %s11 = inlined_call_operand.vmem [shape: f32[2,1,128], index: 11, kind: input, shape index: {}]
  %s12 = inlined_call_operand.vmem [shape: f32[1,1,128], index: 12, kind: output, shape index: {}]
  %s13 = sld [smem:[#allocation0]]
  $region62: #{simple_transformer.1} parent=0
    _
  %s15 = ssub.s32 1, %s13
  %s16 = scalar_select 0, %s15, %s13
  $region1: #{simple_transformer.1} parent=0
    #allocation2 [shape = 'u8[32768]{0}', space=vmem, size = 0x8000, scoped, tag = 'input window, operand 8, single buffered']
    #allocation3 [shape = 's32[1]{0}', space=sflag, size = 0x4, scoped, tag = 'scoped memory for simple_transformer.1']
    %17 = vsyncpa [#allocation3], 0
    // Predicated region
    $region2: #{simple_transformer.1} parent=1 // pred_check
      _
    $region3: #{simple_transformer.1} parent=1 // pred_check_branch
      %19 = sbr.rel (0) target = $region5
    $region4: #{simple_transformer.1} parent=1 // pred_region
      _
    $region5: #{simple_transformer.1} parent=1 // pred_fallthru
      _
    // Predicated region
    $region6: #{simple_transformer.1} parent=1 // pred_check
      _
    $region7: #{simple_transformer.1} parent=1 // pred_check_branch
      %21 = sbr.rel (0) target = $region9
    $region8: #{simple_transformer.1} parent=1 // pred_region
      _
    $region9: #{simple_transformer.1} parent=1 // pred_fallthru
      _
    // Predicated region
    $region10: #{simple_transformer.1} parent=1 // pred_check
      _
    $region11: #{simple_transformer.1} parent=1 // pred_check_branch
      %23 = sbr.rel (0) target = $region13
    $region12: #{simple_transformer.1} parent=1 // pred_region
      _
    $region13: #{simple_transformer.1} parent=1 // pred_fallthru
      _
    // Predicated region
    $region14: #{simple_transformer.1} parent=1 // pred_check
      _
    $region15: #{simple_transformer.1} parent=1 // pred_check_branch
      %25 = sbr.rel (0) target = $region17
    $region16: #{simple_transformer.1} parent=1 // pred_region
      _
    $region17: #{simple_transformer.1} parent=1 // pred_fallthru
      _
    // Predicated region
    $region18: #{simple_transformer.1} parent=1 // pred_check
      _
    $region19: #{simple_transformer.1} parent=1 // pred_check_branch
      %27 = sbr.rel (0) target = $region21
    $region20: #{simple_transformer.1} parent=1 // pred_region
      _
    $region21: #{simple_transformer.1} parent=1 // pred_fallthru
      _
    // Predicated region
    $region22: #{simple_transformer.1} parent=1 // pred_check
      _
    $region23: #{simple_transformer.1} parent=1 // pred_check_branch
      %29 = sbr.rel (0) target = $region25
    $region24: #{simple_transformer.1} parent=1 // pred_region
      _
    $region25: #{simple_transformer.1} parent=1 // pred_fallthru
      _
    // Predicated region
    $region26: #{simple_transformer.1} parent=1 // pred_check
      _
    $region27: #{simple_transformer.1} parent=1 // pred_check_branch
      %31 = sbr.rel (0) target = $region29
    $region28: #{simple_transformer.1} parent=1 // pred_region
      _
    $region29: #{simple_transformer.1} parent=1 // pred_fallthru
      _
    // Predicated region
    $region30: #{simple_transformer.1} parent=1 // pred_check
      _
    $region31: #{simple_transformer.1} parent=1 // pred_check_branch
      %33 = sbr.rel (0) target = $region33
    $region32: #{simple_transformer.1} parent=1 // pred_region
      _
    $region33: #{simple_transformer.1} parent=1 // pred_fallthru
      _
    // Predicated region
    $region34: #{simple_transformer.1} parent=1 // pred_check
      _
    $region35: #{simple_transformer.1} parent=1 // pred_check_branch
      %35 = sbr.rel (0) target = $region37
    $region36: #{simple_transformer.1} parent=1 // pred_region
      %37 = vsyncadd [#allocation3], 0
      %s38 = sshll.u32 %s8, 4
      %s39 = int_to_ptr.hbm [resolvable:$true] %s38
      %s40 = sshll.u32 [#allocation2], 4
      %s41 = int_to_ptr.vmem [resolvable:$true] %s40
      %46 = dma.hbm_to_vmem [thread:$0]  %s39, 1024, %s41, [#allocation3], 64, 64, 4
    $region37: #{simple_transformer.1} parent=1 // pred_fallthru
      _
    // Predicated region
    $region38: #{simple_transformer.1} parent=1 // pred_check
      _
    $region39: #{simple_transformer.1} parent=1 // pred_check_branch
      %48 = sbr.rel (0) target = $region41
    $region40: #{simple_transformer.1} parent=1 // pred_region
      _
    $region41: #{simple_transformer.1} parent=1 // pred_fallthru
      _
    // Predicated region
    $region42: #{simple_transformer.1} parent=1 // pred_check
      _
    $region43: #{simple_transformer.1} parent=1 // pred_check_branch
      %50 = sbr.rel (0) target = $region45
    $region44: #{simple_transformer.1} parent=1 // pred_region
      _
    $region45: #{simple_transformer.1} parent=1 // pred_fallthru
      _
    // Predicated region
    $region46: #{simple_transformer.1} parent=1 // pred_check
      _
    $region47: #{simple_transformer.1} parent=1 // pred_check_branch
      %52 = sbr.rel (0) target = $region49
    $region48: #{simple_transformer.1} parent=1 // pred_region
      _
    $region49: #{simple_transformer.1} parent=1 // pred_fallthru
      _
    // Predicated region
    $region50: #{simple_transformer.1} parent=1 // pred_check
      _
    $region51: #{simple_transformer.1} parent=1 // pred_check_branch
      %54 = sbr.rel (0) target = $region53
    $region52: #{simple_transformer.1} parent=1 // pred_region
      %56 = dma.done [#allocation3], 1024
    $region53: #{simple_transformer.1} parent=1 // pred_fallthru
      _
    %v58 = vld [vmem:[%s0] sm:$0xff]
    %v59 = vld [vmem:[%s0 + $0x8] sm:$0xff]
    %v60 = vld [vmem:[%s1] sm:$0xff]
    %v61 = vadd.f32 %v58, %v60
    %v62 = vadd.f32 %v59, %v60
    %vm63 = vcmask 523264
    %v64 = vsel %vm63, %v61, 0.0
    %65 = vadd.xlane.f32.xlu0 %v64
    %v66 = vpop.xlane.xlu0 %65
    %v67 = vsel %vm63, %v62, 0.0
    %68 = vadd.xlane.f32.xlu0 %v67
    %v69 = vpop.xlane.xlu0 %68
    %vm70 = vcmp.ne.f32.partialorder %v66, 0.0
    %vm71 = vcmp.ne.f32.partialorder %v69, 0.0
    %v72 = vsel %vm70, 1, 0
    %v73 = vsel %vm71, 1, 0
    %v74 = vcvt.s32.f32 %v72
    %v75 = vcvt.s32.f32 %v73
    %v76 = vsub.f32 %v74, 1.0
    %v77 = vsub.f32 %v75, 1.0
    %v78 = vmul.f32 %v76, 1e+09
    %v79 = vmul.f32 %v77, 1e+09
    %v80 = vld [vmem:[%s2] sm:$0xff]
    %v81 = vld [vmem:[%s2 + $0x8] sm:$0xff]
    %v82 = vld [vmem:[%s3] sm:$0x3]
    %v83 = vld [vmem:[%s10] sm:$0xff]
    %v84 = vld [vmem:[%s10 + $0x8] sm:$0xff]
    %v85 = vld [vmem:[%s11] sm:$0x1]
    %v86 = vpack.c.bf16 %v62, %v61
    %v87 = vld [vmem:[%s4] sm:$0xf]
    %v88 = vld [vmem:[%s4 + $0x4] sm:$0xf]
    %v89 = vld [vmem:[%s4 + $0x8] sm:$0xf]
    %v90 = vld [vmem:[%s4 + $0xc] sm:$0xf]
    %v91 = vld [vmem:[%s4 + $0x10] sm:$0xf]
    %v92 = vld [vmem:[%s4 + $0x14] sm:$0xf]
    %v93 = vld [vmem:[%s4 + $0x18] sm:$0xf]
    %v94 = vld [vmem:[%s4 + $0x1c] sm:$0xf]
    %v95 = vperm.slane %v83, 0
    %v104 = vunpack.c.l.b16 %v87
    %v105 = vunpack.c.l.b16 %v88
    %v106 = vunpack.c.l.b16 %v89
    %v107 = vunpack.c.l.b16 %v90
    %v108 = vunpack.c.l.b16 %v91
    %v109 = vunpack.c.l.b16 %v92
    %v110 = vunpack.c.l.b16 %v93
    %v111 = vunpack.c.l.b16 %v94
    %v112 = vpack.c.b16 %v105, %v104
    %v113 = vpack.c.b16 %v107, %v106
    %v114 = vpack.c.b16 %v109, %v108
    %v115 = vpack.c.b16 %v111, %v110
    %v121 = vsel %vm63, %v86, 0
    %123 = vmatpush.bf16.msra.mxu0 0
    %124 = vmatpush.bf16.msra.mxu0 0
    %125 = vmatpush.bf16.msra.mxu0 0
    %126 = vmatpush.bf16.msra.mxu0 0
    %127 = vmatpush.bf16.msra.mxu0 %v115
    %128 = vmatpush.bf16.msra.mxu0 %v114
    %129 = vmatpush.bf16.msra.mxu0 %v113
    %130 = vmatpush.bf16.msra.mxu0 %v112
    %131 = vmatmul.bf16.gmra.mxu0 %v121
    %v132 = vpop.f32.mrf.mxu0
    %v133 = vadd.f32 %v95, %v132
    %v134 = vpop.f32.mrf.mxu0
    %v135 = vadd.f32 %v95, %v134
    %136 = vdwg.mxu0
    %v137 = vld [vmem:[%s5] sm:$0xf]
    %v138 = vld [vmem:[%s5 + $0x4] sm:$0xf]
    %v139 = vld [vmem:[%s5 + $0x8] sm:$0xf]
    %v140 = vld [vmem:[%s5 + $0xc] sm:$0xf]
    %v141 = vld [vmem:[%s5 + $0x10] sm:$0xf]
    %v142 = vld [vmem:[%s5 + $0x14] sm:$0xf]
    %v143 = vld [vmem:[%s5 + $0x18] sm:$0xf]
    %v144 = vld [vmem:[%s5 + $0x1c] sm:$0xf]
    %v145 = vperm.slane %v83, 1
    %v154 = vunpack.c.l.b16 %v137
    %v155 = vunpack.c.l.b16 %v138
    %v156 = vunpack.c.l.b16 %v139
    %v157 = vunpack.c.l.b16 %v140
    %v158 = vunpack.c.l.b16 %v141
    %v159 = vunpack.c.l.b16 %v142
    %v160 = vunpack.c.l.b16 %v143
    %v161 = vunpack.c.l.b16 %v144
    %v162 = vpack.c.b16 %v155, %v154
    %v163 = vpack.c.b16 %v157, %v156
    %v164 = vpack.c.b16 %v159, %v158
    %v165 = vpack.c.b16 %v161, %v160
    %170 = vmatpush.bf16.msra.mxu0 0
    %171 = vmatpush.bf16.msra.mxu0 0
    %172 = vmatpush.bf16.msra.mxu0 0
    %173 = vmatpush.bf16.msra.mxu0 0
    %174 = vmatpush.bf16.msra.mxu0 %v165
    %175 = vmatpush.bf16.msra.mxu0 %v164
    %176 = vmatpush.bf16.msra.mxu0 %v163
    %177 = vmatpush.bf16.msra.mxu0 %v162
    %178 = vmatmul.bf16.gmra.mxu0 %v121
    %v179 = vpop.f32.mrf.mxu0
    %v180 = vadd.f32 %v145, %v179
    %v181 = vpop.f32.mrf.mxu0
    %v182 = vadd.f32 %v145, %v181
    %183 = vdwg.mxu0
    %v184 = vld [vmem:[%s6] sm:$0xf]
    %v185 = vld [vmem:[%s6 + $0x4] sm:$0xf]
    %v186 = vld [vmem:[%s6 + $0x8] sm:$0xf]
    %v187 = vld [vmem:[%s6 + $0xc] sm:$0xf]
    %v188 = vld [vmem:[%s6 + $0x10] sm:$0xf]
    %v189 = vld [vmem:[%s6 + $0x14] sm:$0xf]
    %v190 = vld [vmem:[%s6 + $0x18] sm:$0xf]
    %v191 = vld [vmem:[%s6 + $0x1c] sm:$0xf]
    %v192 = vperm.slane %v83, 2
    %v201 = vunpack.c.l.b16 %v184
    %v202 = vunpack.c.l.b16 %v185
    %v203 = vunpack.c.l.b16 %v186
    %v204 = vunpack.c.l.b16 %v187
    %v205 = vunpack.c.l.b16 %v188
    %v206 = vunpack.c.l.b16 %v189
    %v207 = vunpack.c.l.b16 %v190
    %v208 = vunpack.c.l.b16 %v191
    %v209 = vpack.c.b16 %v202, %v201
    %v210 = vpack.c.b16 %v204, %v203
    %v211 = vpack.c.b16 %v206, %v205
    %v212 = vpack.c.b16 %v208, %v207
    %217 = vmatpush.bf16.msra.mxu0 0
    %218 = vmatpush.bf16.msra.mxu0 0
    %219 = vmatpush.bf16.msra.mxu0 0
    %220 = vmatpush.bf16.msra.mxu0 0
    %221 = vmatpush.bf16.msra.mxu0 %v212
    %222 = vmatpush.bf16.msra.mxu0 %v211
    %223 = vmatpush.bf16.msra.mxu0 %v210
    %224 = vmatpush.bf16.msra.mxu0 %v209
    %225 = vmatmul.bf16.gmra.mxu0 %v121
    %v226 = vpop.f32.mrf.mxu0
    %v227 = vadd.f32 %v192, %v226
    %v228 = vpop.f32.mrf.mxu0
    %v229 = vadd.f32 %v192, %v228
    %230 = vdwg.mxu0
    %v231 = vpack.c.bf16 %v133, %v133
    %v232 = vpack.c.bf16 %v135, %v135
    %v233 = vpack.c.bf16 %v180, %v180
    %v234 = vpack.c.bf16 %v182, %v182
    %v235 = vpack.c.bf16 %v227, %v227
    %v236 = vpack.c.bf16 %v229, %v229
    %v238 = vpack.i.b16 %v82, %v82
    %v240 = vperm.slane %v238, 0
    %v241 = vunpack.c.l.bf16 %v233
    %v242 = vunpack.c.l.bf16 %v234
    %v243 = vunpack.c.l.bf16 %v240
    %v244 = vmul.f32 %v241, %v243
    %v245 = vmul.f32 %v242, %v243
    %v246 = vpack.c.bf16 %v244, %v244
    %v247 = vpack.c.bf16 %v245, %v245
    %v248 = vunpack.c.l.bf16 %v235
    %v249 = vunpack.c.l.bf16 %v236
    %v250 = vmul.f32 %v248, %v243
    %v251 = vmul.f32 %v249, %v243
    %v252 = vpack.c.bf16 %v250, %v250
    %v253 = vpack.c.bf16 %v251, %v251
    %v256 = vunpack.c.l.b16 %v231
    %v257 = vunpack.c.l.b16 %v232
    %v258 = vpack.c.b16 %v257, %v256
    %v261 = vunpack.c.l.b16 %v246
    %v262 = vunpack.c.l.b16 %v247
    %v263 = vpack.c.b16 %v262, %v261
    %v265 = vsel %vm63, %v258, 0
    %v268 = vsel %vm63, %v263, 0
    %270 = vmatpush.bf16.xpose.msra.mxu0 0
    %271 = vmatpush.bf16.xpose.msra.mxu0 0
    %272 = vmatpush.bf16.xpose.msra.mxu0 0
    %273 = vmatpush.bf16.xpose.msra.mxu0 0
    %274 = vmatpush.bf16.xpose.msra.mxu0 0
    %275 = vmatpush.bf16.xpose.msra.mxu0 0
    %276 = vmatpush.bf16.xpose.msra.mxu0 0
    %277 = vmatpush.bf16.xpose.msra.mxu0 %v268
    %278 = vmatmul.bf16.gmra.mxu0 %v265
    %v279 = vpop.f32.mrf.mxu0
    %v280 = vadd.f32 0.0, %v279
    %v281 = vpop.f32.mrf.mxu0
    %v282 = vadd.f32 0.0, %v281
    %283 = vdwg.mxu0
    %v284 = vmul.f32 %v280, 0.25
    %v285 = vmul.f32 %v282, 0.25
    %v286 = vadd.f32 %v284, %v80
    %v287 = vadd.f32 %v285, %v81
    %v290 = vlaneseq
    %v291 = vand.u32 %v290, 127
    %v292 = vperm.slane %v78, %v291
    %v293 = vadd.s32 %v291, 4294967288
    %v294 = vperm.slane %v79, %v293
    %vm295 = vcmask 130112
    %v296 = vsel %vm295, %v294, %v292
    %vm297 = vcmask 1041409
    %vm298 = vcmask 1042434
    %v299 = vsel %vm298, %v296, %v296
    %vm300 = vcmask 1043459
    %v301 = vsel %vm300, %v296, %v299
    %vm302 = vcmask 1044484
    %v303 = vsel %vm302, %v296, %v301
    %vm304 = vcmask 1045509
    %v305 = vsel %vm304, %v296, %v303
    %vm306 = vcmask 1046534
    %v307 = vsel %vm306, %v296, %v305
    %vm308 = vcmask 1047559
    %v309 = vsel %vm308, %v296, %v307
    %v311 = vadd.f32 %v286, %v309
    %v312 = vadd.f32 %v287, %v309
    %vm313 = vcmask 130048
    %v314 = vsel %vm313, %v311, -inf
    %315 = vmax.xlane.f32.xlu0 %v314
    %v316 = vpop.xlane.xlu0 %315
    %v317 = vsel %vm313, %v312, -inf
    %318 = vmax.xlane.f32.xlu0 %v317
    %v319 = vpop.xlane.xlu0 %318
    %v320 = vsub.f32 %v311, %v316
    %v321 = vsub.f32 %v312, %v319
    %v322 = vmul.f32 %v320, 1.442695
    %v323 = vpow.pop %v322
    %v324 = vmul.f32 %v321, 1.442695
    %v325 = vpow.pop %v324
    %v326 = vsel %vm313, %v323, 0.0
    %327 = vadd.xlane.f32.xlu0 %v326
    %v328 = vpop.xlane.xlu0 %327
    %v329 = vsel %vm313, %v325, 0.0
    %330 = vadd.xlane.f32.xlu0 %v329
    %v331 = vpop.xlane.xlu0 %330
    %v332 = vrcp.pop %v328
    %v333 = vmul.f32 %v328, %v332
    %v334 = vsub.f32 1.0, %v333
    %v335 = vmul.f32 %v332, %v334
    %v336 = vadd.f32 %v332, %v335
    %vm337 = vweird.f32 %v328
    %vm338 = vweird.f32 %v332
    %vm339 = vmor %vm337, %vm338
    %v340 = vsel %vm339, %v332, %v336
    %v341 = vand.u32 2147483647, %v328
    %vm342 = vcmp.eq.f32.partialorder %v341, 8.507059e+37
    %v343 = vand.u32 %v328, 2147483648
    %v344 = vor.u32 1.1754944e-38, %v343
    %v345 = vsel %vm342, %v344, %v340
    %v346 = vmul.f32 %v323, %v345
    %v347 = vrcp.pop %v331
    %v348 = vmul.f32 %v331, %v347
    %v349 = vsub.f32 1.0, %v348
    %v350 = vmul.f32 %v347, %v349
    %v351 = vadd.f32 %v347, %v350
    %vm352 = vweird.f32 %v331
    %vm353 = vweird.f32 %v347
    %vm354 = vmor %vm352, %vm353
    %v355 = vsel %vm354, %v347, %v351
    %v356 = vand.u32 2147483647, %v331
    %vm357 = vcmp.eq.f32.partialorder %v356, 8.507059e+37
    %v358 = vand.u32 %v331, 2147483648
    %v359 = vor.u32 1.1754944e-38, %v358
    %v360 = vsel %vm357, %v359, %v355
    %v361 = vmul.f32 %v325, %v360
    %v362 = vpack.c.bf16 %v346, %v346
    %v363 = vpack.c.bf16 %v361, %v361
    %v364 = vshrl.u32 %v82, 16
    %v365 = vpack.i.b16 %v364, %v364
    %v367 = vperm.slane %v365, 0
    %v368 = vunpack.c.l.bf16 %v367
    %v369 = vmul.f32 %v241, %v368
    %v370 = vmul.f32 %v242, %v368
    %v371 = vpack.c.bf16 %v369, %v369
    %v372 = vpack.c.bf16 %v370, %v370
    %v373 = vmul.f32 %v248, %v368
    %v374 = vmul.f32 %v249, %v368
    %v375 = vpack.c.bf16 %v373, %v373
    %v376 = vpack.c.bf16 %v374, %v374
    %v379 = vunpack.c.l.b16 %v371
    %v380 = vunpack.c.l.b16 %v372
    %v381 = vpack.c.b16 %v380, %v379
    %v383 = vsel %vm63, %v381, 0
    %385 = vmatpush.bf16.xpose.msra.mxu0 0
    %386 = vmatpush.bf16.xpose.msra.mxu0 0
    %387 = vmatpush.bf16.xpose.msra.mxu0 0
    %388 = vmatpush.bf16.xpose.msra.mxu0 0
    %389 = vmatpush.bf16.xpose.msra.mxu0 0
    %390 = vmatpush.bf16.xpose.msra.mxu0 0
    %391 = vmatpush.bf16.xpose.msra.mxu0 0
    %392 = vmatpush.bf16.xpose.msra.mxu0 %v383
    %393 = vmatmul.bf16.gmra.mxu0 %v265
    %v394 = vpop.f32.mrf.mxu0
    %v395 = vadd.f32 0.0, %v394
    %v396 = vpop.f32.mrf.mxu0
    %v397 = vadd.f32 0.0, %v396
    %398 = vdwg.mxu0
    %v399 = vmul.f32 %v395, 0.25
    %v400 = vmul.f32 %v397, 0.25
    %v401 = vadd.f32 %v399, %v80
    %v402 = vadd.f32 %v400, %v81
    %v403 = vadd.f32 %v401, %v309
    %v404 = vadd.f32 %v402, %v309
    %v405 = vsel %vm313, %v403, -inf
    %406 = vmax.xlane.f32.xlu0 %v405
    %v407 = vpop.xlane.xlu0 %406
    %v408 = vsel %vm313, %v404, -inf
    %409 = vmax.xlane.f32.xlu0 %v408
    %v410 = vpop.xlane.xlu0 %409
    %v411 = vsub.f32 %v403, %v407
    %v412 = vsub.f32 %v404, %v410
    %v413 = vmul.f32 %v411, 1.442695
    %v414 = vpow.pop %v413
    %v415 = vmul.f32 %v412, 1.442695
    %v416 = vpow.pop %v415
    %v417 = vsel %vm313, %v414, 0.0
    %418 = vadd.xlane.f32.xlu0 %v417
    %v419 = vpop.xlane.xlu0 %418
    %v420 = vsel %vm313, %v416, 0.0
    %421 = vadd.xlane.f32.xlu0 %v420
    %v422 = vpop.xlane.xlu0 %421
    %v423 = vrcp.pop %v419
    %v424 = vmul.f32 %v419, %v423
    %v425 = vsub.f32 1.0, %v424
    %v426 = vmul.f32 %v423, %v425
    %v427 = vadd.f32 %v423, %v426
    %vm428 = vweird.f32 %v419
    %vm429 = vweird.f32 %v423
    %vm430 = vmor %vm428, %vm429
    %v431 = vsel %vm430, %v423, %v427
    %v432 = vand.u32 2147483647, %v419
    %vm433 = vcmp.eq.f32.partialorder %v432, 8.507059e+37
    %v434 = vand.u32 %v419, 2147483648
    %v435 = vor.u32 1.1754944e-38, %v434
    %v436 = vsel %vm433, %v435, %v431
    %v437 = vmul.f32 %v414, %v436
    %v438 = vrcp.pop %v422
    %v439 = vmul.f32 %v422, %v438
    %v440 = vsub.f32 1.0, %v439
    %v441 = vmul.f32 %v438, %v440
    %v442 = vadd.f32 %v438, %v441
    %vm443 = vweird.f32 %v422
    %vm444 = vweird.f32 %v438
    %vm445 = vmor %vm443, %vm444
    %v446 = vsel %vm445, %v438, %v442
    %v447 = vand.u32 2147483647, %v422
    %vm448 = vcmp.eq.f32.partialorder %v447, 8.507059e+37
    %v449 = vand.u32 %v422, 2147483648
    %v450 = vor.u32 1.1754944e-38, %v449
    %v451 = vsel %vm448, %v450, %v446
    %v452 = vmul.f32 %v416, %v451
    %v453 = vpack.c.bf16 %v437, %v437
    %v454 = vpack.c.bf16 %v452, %v452
    %v457 = vunpack.c.l.b16 %v453
    %v458 = vunpack.c.l.b16 %v454
    %v459 = vpack.c.b16 %v458, %v457
    %v462 = vunpack.c.l.b16 %v375
    %v463 = vunpack.c.l.b16 %v376
    %v464 = vpack.c.b16 %v463, %v462
    %v467 = vsel %vm313, %v459, 0
    %469 = vmatpush.bf16.msra.mxu0 0
    %470 = vmatpush.bf16.msra.mxu0 0
    %471 = vmatpush.bf16.msra.mxu0 0
    %472 = vmatpush.bf16.msra.mxu0 0
    %473 = vmatpush.bf16.msra.mxu0 0
    %474 = vmatpush.bf16.msra.mxu0 0
    %475 = vmatpush.bf16.msra.mxu0 0
    %476 = vmatpush.bf16.msra.mxu0 %v464
    %477 = vmatmul.bf16.gmra.mxu0 %v467
    %v478 = vpop.f32.mrf.mxu0
    %v479 = vadd.f32 0.0, %v478
    %v480 = vpop.f32.mrf.mxu0
    %v481 = vadd.f32 0.0, %v480
    %482 = vdwg.mxu0
    %v485 = vunpack.c.l.b16 %v362
    %v486 = vunpack.c.l.b16 %v363
    %v487 = vpack.c.b16 %v486, %v485
    %v490 = vunpack.c.l.b16 %v252
    %v491 = vunpack.c.l.b16 %v253
    %v492 = vpack.c.b16 %v491, %v490
    %v495 = vsel %vm313, %v487, 0
    %497 = vmatpush.bf16.msra.mxu0 0
    %498 = vmatpush.bf16.msra.mxu0 0
    %499 = vmatpush.bf16.msra.mxu0 0
    %500 = vmatpush.bf16.msra.mxu0 0
    %501 = vmatpush.bf16.msra.mxu0 0
    %502 = vmatpush.bf16.msra.mxu0 0
    %503 = vmatpush.bf16.msra.mxu0 0
    %504 = vmatpush.bf16.msra.mxu0 %v492
    %505 = vmatmul.bf16.gmra.mxu0 %v495
    %v506 = vpop.f32.mrf.mxu0
    %v507 = vadd.f32 %v479, %v506
    %v508 = vpop.f32.mrf.mxu0
    %v509 = vadd.f32 %v481, %v508
    %510 = vdwg.mxu0
    %v511 = vperm.slane %v238, 1
    %v512 = vunpack.c.l.bf16 %v511
    %v513 = vmul.f32 %v241, %v512
    %v514 = vmul.f32 %v242, %v512
    %v515 = vpack.c.bf16 %v513, %v513
    %v516 = vpack.c.bf16 %v514, %v514
    %v517 = vmul.f32 %v248, %v512
    %v518 = vmul.f32 %v249, %v512
    %v519 = vpack.c.bf16 %v517, %v517
    %v520 = vpack.c.bf16 %v518, %v518
    %v523 = vunpack.c.l.b16 %v515
    %v524 = vunpack.c.l.b16 %v516
    %v525 = vpack.c.b16 %v524, %v523
    %v527 = vsel %vm63, %v525, 0
    %529 = vmatpush.bf16.xpose.msra.mxu0 0
    %530 = vmatpush.bf16.xpose.msra.mxu0 0
    %531 = vmatpush.bf16.xpose.msra.mxu0 0
    %532 = vmatpush.bf16.xpose.msra.mxu0 0
    %533 = vmatpush.bf16.xpose.msra.mxu0 0
    %534 = vmatpush.bf16.xpose.msra.mxu0 0
    %535 = vmatpush.bf16.xpose.msra.mxu0 0
    %536 = vmatpush.bf16.xpose.msra.mxu0 %v527
    %537 = vmatmul.bf16.gmra.mxu0 %v265
    %v538 = vpop.f32.mrf.mxu0
    %v539 = vadd.f32 0.0, %v538
    %v540 = vpop.f32.mrf.mxu0
    %v541 = vadd.f32 0.0, %v540
    %542 = vdwg.mxu0
    %v543 = vmul.f32 %v539, 0.25
    %v544 = vmul.f32 %v541, 0.25
    %v545 = vadd.f32 %v543, %v80
    %v546 = vadd.f32 %v544, %v81
    %v547 = vadd.f32 %v545, %v309
    %v548 = vadd.f32 %v546, %v309
    %v549 = vsel %vm313, %v547, -inf
    %550 = vmax.xlane.f32.xlu0 %v549
    %v551 = vpop.xlane.xlu0 %550
    %v552 = vsel %vm313, %v548, -inf
    %553 = vmax.xlane.f32.xlu0 %v552
    %v554 = vpop.xlane.xlu0 %553
    %v555 = vsub.f32 %v547, %v551
    %v556 = vsub.f32 %v548, %v554
    %v557 = vmul.f32 %v555, 1.442695
    %v558 = vpow.pop %v557
    %v559 = vmul.f32 %v556, 1.442695
    %v560 = vpow.pop %v559
    %v561 = vsel %vm313, %v558, 0.0
    %562 = vadd.xlane.f32.xlu0 %v561
    %v563 = vpop.xlane.xlu0 %562
    %v564 = vsel %vm313, %v560, 0.0
    %565 = vadd.xlane.f32.xlu0 %v564
    %v566 = vpop.xlane.xlu0 %565
    %v567 = vrcp.pop %v563
    %v568 = vmul.f32 %v563, %v567
    %v569 = vsub.f32 1.0, %v568
    %v570 = vmul.f32 %v567, %v569
    %v571 = vadd.f32 %v567, %v570
    %vm572 = vweird.f32 %v563
    %vm573 = vweird.f32 %v567
    %vm574 = vmor %vm572, %vm573
    %v575 = vsel %vm574, %v567, %v571
    %v576 = vand.u32 2147483647, %v563
    %vm577 = vcmp.eq.f32.partialorder %v576, 8.507059e+37
    %v578 = vand.u32 %v563, 2147483648
    %v579 = vor.u32 1.1754944e-38, %v578
    %v580 = vsel %vm577, %v579, %v575
    %v581 = vmul.f32 %v558, %v580
    %v582 = vrcp.pop %v566
    %v583 = vmul.f32 %v566, %v582
    %v584 = vsub.f32 1.0, %v583
    %v585 = vmul.f32 %v582, %v584
    %v586 = vadd.f32 %v582, %v585
    %vm587 = vweird.f32 %v566
    %vm588 = vweird.f32 %v582
    %vm589 = vmor %vm587, %vm588
    %v590 = vsel %vm589, %v582, %v586
    %v591 = vand.u32 2147483647, %v566
    %vm592 = vcmp.eq.f32.partialorder %v591, 8.507059e+37
    %v593 = vand.u32 %v566, 2147483648
    %v594 = vor.u32 1.1754944e-38, %v593
    %v595 = vsel %vm592, %v594, %v590
    %v596 = vmul.f32 %v560, %v595
    %v597 = vpack.c.bf16 %v581, %v581
    %v598 = vpack.c.bf16 %v596, %v596
    %v601 = vunpack.c.l.b16 %v597
    %v602 = vunpack.c.l.b16 %v598
    %v603 = vpack.c.b16 %v602, %v601
    %v606 = vunpack.c.l.b16 %v519
    %v607 = vunpack.c.l.b16 %v520
    %v608 = vpack.c.b16 %v607, %v606
    %v611 = vsel %vm313, %v603, 0
    %613 = vmatpush.bf16.msra.mxu0 0
    %614 = vmatpush.bf16.msra.mxu0 0
    %615 = vmatpush.bf16.msra.mxu0 0
    %616 = vmatpush.bf16.msra.mxu0 0
    %617 = vmatpush.bf16.msra.mxu0 0
    %618 = vmatpush.bf16.msra.mxu0 0
    %619 = vmatpush.bf16.msra.mxu0 0
    %620 = vmatpush.bf16.msra.mxu0 %v608
    %621 = vmatmul.bf16.gmra.mxu0 %v611
    %v622 = vpop.f32.mrf.mxu0
    %v623 = vadd.f32 0.0, %v622
    %v624 = vpop.f32.mrf.mxu0
    %v625 = vadd.f32 0.0, %v624
    %626 = vdwg.mxu0
    %v627 = vadd.f32 %v507, %v623
    %v628 = vadd.f32 %v509, %v625
    %v629 = vperm.slane %v365, 1
    %v630 = vunpack.c.l.bf16 %v629
    %v631 = vmul.f32 %v241, %v630
    %v632 = vmul.f32 %v242, %v630
    %v633 = vpack.c.bf16 %v631, %v631
    %v634 = vpack.c.bf16 %v632, %v632
    %v635 = vmul.f32 %v248, %v630
    %v636 = vmul.f32 %v249, %v630
    %v637 = vpack.c.bf16 %v635, %v635
    %v638 = vpack.c.bf16 %v636, %v636
    %v641 = vunpack.c.l.b16 %v633
    %v642 = vunpack.c.l.b16 %v634
    %v643 = vpack.c.b16 %v642, %v641
    %v645 = vsel %vm63, %v643, 0
    %647 = vmatpush.bf16.xpose.msra.mxu0 0
    %648 = vmatpush.bf16.xpose.msra.mxu0 0
    %649 = vmatpush.bf16.xpose.msra.mxu0 0
    %650 = vmatpush.bf16.xpose.msra.mxu0 0
    %651 = vmatpush.bf16.xpose.msra.mxu0 0
    %652 = vmatpush.bf16.xpose.msra.mxu0 0
    %653 = vmatpush.bf16.xpose.msra.mxu0 0
    %654 = vmatpush.bf16.xpose.msra.mxu0 %v645
    %655 = vmatmul.bf16.gmra.mxu0 %v265
    %v656 = vpop.f32.mrf.mxu0
    %v657 = vadd.f32 0.0, %v656
    %v658 = vpop.f32.mrf.mxu0
    %v659 = vadd.f32 0.0, %v658
    %660 = vdwg.mxu0
    %v661 = vmul.f32 %v657, 0.25
    %v662 = vmul.f32 %v659, 0.25
    %v663 = vadd.f32 %v661, %v80
    %v664 = vadd.f32 %v662, %v81
    %v665 = vadd.f32 %v663, %v309
    %v666 = vadd.f32 %v664, %v309
    %v667 = vsel %vm313, %v665, -inf
    %668 = vmax.xlane.f32.xlu0 %v667
    %v669 = vpop.xlane.xlu0 %668
    %v670 = vsel %vm313, %v666, -inf
    %671 = vmax.xlane.f32.xlu0 %v670
    %v672 = vpop.xlane.xlu0 %671
    %v673 = vsub.f32 %v665, %v669
    %v674 = vsub.f32 %v666, %v672
    %v675 = vmul.f32 %v673, 1.442695
    %v676 = vpow.pop %v675
    %v677 = vmul.f32 %v674, 1.442695
    %v678 = vpow.pop %v677
    %v679 = vsel %vm313, %v676, 0.0
    %680 = vadd.xlane.f32.xlu0 %v679
    %v681 = vpop.xlane.xlu0 %680
    %v682 = vsel %vm313, %v678, 0.0
    %683 = vadd.xlane.f32.xlu0 %v682
    %v684 = vpop.xlane.xlu0 %683
    %v685 = vrcp.pop %v681
    %v686 = vmul.f32 %v681, %v685
    %v687 = vsub.f32 1.0, %v686
    %v688 = vmul.f32 %v685, %v687
    %v689 = vadd.f32 %v685, %v688
    %vm690 = vweird.f32 %v681
    %vm691 = vweird.f32 %v685
    %vm692 = vmor %vm690, %vm691
    %v693 = vsel %vm692, %v685, %v689
    %v694 = vand.u32 2147483647, %v681
    %vm695 = vcmp.eq.f32.partialorder %v694, 8.507059e+37
    %v696 = vand.u32 %v681, 2147483648
    %v697 = vor.u32 1.1754944e-38, %v696
    %v698 = vsel %vm695, %v697, %v693
    %v699 = vmul.f32 %v676, %v698
    %v700 = vrcp.pop %v684
    %v701 = vmul.f32 %v684, %v700
    %v702 = vsub.f32 1.0, %v701
    %v703 = vmul.f32 %v700, %v702
    %v704 = vadd.f32 %v700, %v703
    %vm705 = vweird.f32 %v684
    %vm706 = vweird.f32 %v700
    %vm707 = vmor %vm705, %vm706
    %v708 = vsel %vm707, %v700, %v704
    %v709 = vand.u32 2147483647, %v684
    %vm710 = vcmp.eq.f32.partialorder %v709, 8.507059e+37
    %v711 = vand.u32 %v684, 2147483648
    %v712 = vor.u32 1.1754944e-38, %v711
    %v713 = vsel %vm710, %v712, %v708
    %v714 = vmul.f32 %v678, %v713
    %v715 = vpack.c.bf16 %v699, %v699
    %v716 = vpack.c.bf16 %v714, %v714
    %v719 = vunpack.c.l.b16 %v715
    %v720 = vunpack.c.l.b16 %v716
    %v721 = vpack.c.b16 %v720, %v719
    %v724 = vunpack.c.l.b16 %v637
    %v725 = vunpack.c.l.b16 %v638
    %v726 = vpack.c.b16 %v725, %v724
    %v729 = vsel %vm313, %v721, 0
    %731 = vmatpush.bf16.msra.mxu0 0
    %732 = vmatpush.bf16.msra.mxu0 0
    %733 = vmatpush.bf16.msra.mxu0 0
    %734 = vmatpush.bf16.msra.mxu0 0
    %735 = vmatpush.bf16.msra.mxu0 0
    %736 = vmatpush.bf16.msra.mxu0 0
    %737 = vmatpush.bf16.msra.mxu0 0
    %738 = vmatpush.bf16.msra.mxu0 %v726
    %739 = vmatmul.bf16.gmra.mxu0 %v729
    %v740 = vpop.f32.mrf.mxu0
    %v741 = vadd.f32 0.0, %v740
    %v742 = vpop.f32.mrf.mxu0
    %v743 = vadd.f32 0.0, %v742
    %744 = vdwg.mxu0
    %v745 = vadd.f32 %v627, %v741
    %v746 = vadd.f32 %v628, %v743
    %v747 = vpack.c.bf16 %v746, %v745
    %v748 = vld [vmem:[%s7] sm:$0xf]
    %v749 = vld [vmem:[%s7 + $0x4] sm:$0xf]
    %v750 = vld [vmem:[%s7 + $0x8] sm:$0xf]
    %v751 = vld [vmem:[%s7 + $0xc] sm:$0xf]
    %v752 = vld [vmem:[%s7 + $0x10] sm:$0xf]
    %v753 = vld [vmem:[%s7 + $0x14] sm:$0xf]
    %v754 = vld [vmem:[%s7 + $0x18] sm:$0xf]
    %v755 = vld [vmem:[%s7 + $0x1c] sm:$0xf]
    %v756 = vperm.slane %v83, 3
    %v765 = vunpack.c.l.b16 %v748
    %v766 = vunpack.c.l.b16 %v749
    %v767 = vunpack.c.l.b16 %v750
    %v768 = vunpack.c.l.b16 %v751
    %v769 = vunpack.c.l.b16 %v752
    %v770 = vunpack.c.l.b16 %v753
    %v771 = vunpack.c.l.b16 %v754
    %v772 = vunpack.c.l.b16 %v755
    %v773 = vpack.c.b16 %v766, %v765
    %v774 = vpack.c.b16 %v768, %v767
    %v775 = vpack.c.b16 %v770, %v769
    %v776 = vpack.c.b16 %v772, %v771
    %v782 = vsel %vm63, %v747, 0
    %784 = vmatpush.bf16.msra.mxu0 0
    %785 = vmatpush.bf16.msra.mxu0 0
    %786 = vmatpush.bf16.msra.mxu0 0
    %787 = vmatpush.bf16.msra.mxu0 0
    %788 = vmatpush.bf16.msra.mxu0 %v776
    %789 = vmatpush.bf16.msra.mxu0 %v775
    %790 = vmatpush.bf16.msra.mxu0 %v774
    %791 = vmatpush.bf16.msra.mxu0 %v773
    %792 = vmatmul.bf16.gmra.mxu0 %v782
    %v793 = vpop.f32.mrf.mxu0
    %v794 = vadd.f32 %v756, %v793
    %v795 = vpop.f32.mrf.mxu0
    %v796 = vadd.f32 %v756, %v795
    %797 = vdwg.mxu0
    %v798 = vadd.f32 %v61, %v794
    %v799 = vadd.f32 %v62, %v796
    %v800 = vsel %vm63, %v798, 0.0
    %801 = vadd.xlane.f32.xlu0 %v800
    %v802 = vpop.xlane.xlu0 %801
    %v803 = vsel %vm63, %v799, 0.0
    %804 = vadd.xlane.f32.xlu0 %v803
    %v805 = vpop.xlane.xlu0 %804
    %v806 = vmul.f32 %v798, %v798
    %v807 = vmul.f32 %v799, %v799
    %v808 = vsel %vm63, %v806, 0.0
    %809 = vadd.xlane.f32.xlu0 %v808
    %v810 = vpop.xlane.xlu0 %809
    %v811 = vsel %vm63, %v807, 0.0
    %812 = vadd.xlane.f32.xlu0 %v811
    %v813 = vpop.xlane.xlu0 %812
    %v814 = vmul.f32 %v802, 0.015625
    %v815 = vmul.f32 %v805, 0.015625
    %v816 = vmul.f32 %v810, 0.015625
    %v817 = vmul.f32 %v813, 0.015625
    %v818 = vmul.f32 %v814, %v814
    %v819 = vmul.f32 %v815, %v815
    %v820 = vsub.f32 %v816, %v818
    %v821 = vsub.f32 %v817, %v819
    %v822 = vmax.f32 %v820, 0.0
    %v823 = vmax.f32 %v821, 0.0
    %v824 = vsub.f32 %v798, %v814
    %v825 = vsub.f32 %v799, %v815
    %v826 = vadd.f32 %v822, 1e-05
    %v827 = vadd.f32 %v823, 1e-05
    %v828 = vrsqrt.pop %v826
    %v829 = vmul.f32 %v828, %v826
    %v830 = vmul.f32 %v829, %v828
    %v831 = vmul.f32 0.5, %v830
    %v832 = vsub.f32 1.5, %v831
    %v833 = vmul.f32 %v828, %v832
    %vm834 = vweird.f32 %v826
    %vm835 = vweird.f32 %v828
    %vm836 = vmor %vm834, %vm835
    %v837 = vsel %vm836, %v828, %v833
    %v838 = vrsqrt.pop %v827
    %v839 = vmul.f32 %v838, %v827
    %v840 = vmul.f32 %v839, %v838
    %v841 = vmul.f32 0.5, %v840
    %v842 = vsub.f32 1.5, %v841
    %v843 = vmul.f32 %v838, %v842
    %vm844 = vweird.f32 %v827
    %vm845 = vweird.f32 %v838
    %vm846 = vmor %vm844, %vm845
    %v847 = vsel %vm846, %v838, %v843
    %v848 = vmul.f32 %v824, %v837
    %v849 = vmul.f32 %v825, %v847
    %v850 = vperm.slane %v83, 4
    %v851 = vmul.f32 %v848, %v850
    %v852 = vmul.f32 %v849, %v850
    %v853 = vperm.slane %v83, 5
    %v854 = vadd.f32 %v851, %v853
    %v855 = vadd.f32 %v852, %v853
    %v856 = vpack.c.bf16 %v855, %v854
    %v857 = vld [vmem:[#allocation2] sm:$0xf]
    %v858 = vld [vmem:[#allocation2 + $0x4] sm:$0xf]
    %v859 = vld [vmem:[#allocation2 + $0x8] sm:$0xf]
    %v860 = vld [vmem:[#allocation2 + $0xc] sm:$0xf]
    %v861 = vld [vmem:[#allocation2 + $0x10] sm:$0xf]
    %v862 = vld [vmem:[#allocation2 + $0x14] sm:$0xf]
    %v863 = vld [vmem:[#allocation2 + $0x18] sm:$0xf]
    %v864 = vld [vmem:[#allocation2 + $0x1c] sm:$0xf]
    %v866 = vperm.slane %v85, 0
    %v876 = vunpack.c.l.b16 %v857
    %v877 = vunpack.c.l.b16 %v858
    %v878 = vunpack.c.l.b16 %v859
    %v879 = vunpack.c.l.b16 %v860
    %v880 = vunpack.c.l.b16 %v861
    %v881 = vunpack.c.l.b16 %v862
    %v882 = vunpack.c.l.b16 %v863
    %v883 = vunpack.c.l.b16 %v864
    %v884 = vpack.c.b16 %v877, %v876
    %v885 = vpack.c.b16 %v879, %v878
    %v886 = vpack.c.b16 %v881, %v880
    %v887 = vpack.c.b16 %v883, %v882
    %v893 = vsel %vm63, %v856, 0
    %895 = vmatpush.bf16.msra.mxu0 0
    %896 = vmatpush.bf16.msra.mxu0 0
    %897 = vmatpush.bf16.msra.mxu0 0
    %898 = vmatpush.bf16.msra.mxu0 0
    %899 = vmatpush.bf16.msra.mxu0 %v887
    %900 = vmatpush.bf16.msra.mxu0 %v886
    %901 = vmatpush.bf16.msra.mxu0 %v885
    %902 = vmatpush.bf16.msra.mxu0 %v884
    %903 = vmatmul.bf16.gmra.mxu0 %v893
    %v904 = vpop.f32.mrf.mxu0
    %v905 = vadd.f32 %v866, %v904
    %v906 = vpop.f32.mrf.mxu0
    %v907 = vadd.f32 %v866, %v906
    %908 = vdwg.mxu0
    %v909 = vmax.f32 %v905, 0.0
    %v910 = vmax.f32 %v907, 0.0
    %v911 = vpack.c.bf16 %v910, %v909
    %v912 = vld [vmem:[%s9] sm:$0xf]
    %v913 = vld [vmem:[%s9 + $0x4] sm:$0xf]
    %v914 = vld [vmem:[%s9 + $0x8] sm:$0xf]
    %v915 = vld [vmem:[%s9 + $0xc] sm:$0xf]
    %v916 = vld [vmem:[%s9 + $0x10] sm:$0xf]
    %v917 = vld [vmem:[%s9 + $0x14] sm:$0xf]
    %v918 = vld [vmem:[%s9 + $0x18] sm:$0xf]
    %v919 = vld [vmem:[%s9 + $0x1c] sm:$0xf]
    %v920 = vld [vmem:[%s9 + $0x20] sm:$0xf]
    %v921 = vld [vmem:[%s9 + $0x24] sm:$0xf]
    %v922 = vld [vmem:[%s9 + $0x28] sm:$0xf]
    %v923 = vld [vmem:[%s9 + $0x2c] sm:$0xf]
    %v924 = vld [vmem:[%s9 + $0x30] sm:$0xf]
    %v925 = vld [vmem:[%s9 + $0x34] sm:$0xf]
    %v926 = vld [vmem:[%s9 + $0x38] sm:$0xf]
    %v927 = vld [vmem:[%s9 + $0x3c] sm:$0xf]
    %v928 = vperm.slane %v84, 0
    %v945 = vunpack.c.l.b16 %v912
    %v946 = vunpack.c.l.b16 %v913
    %v947 = vunpack.c.l.b16 %v914
    %v948 = vunpack.c.l.b16 %v915
    %v949 = vunpack.c.l.b16 %v916
    %v950 = vunpack.c.l.b16 %v917
    %v951 = vunpack.c.l.b16 %v918
    %v952 = vunpack.c.l.b16 %v919
    %v953 = vunpack.c.l.b16 %v920
    %v954 = vunpack.c.l.b16 %v921
    %v955 = vunpack.c.l.b16 %v922
    %v956 = vunpack.c.l.b16 %v923
    %v957 = vunpack.c.l.b16 %v924
    %v958 = vunpack.c.l.b16 %v925
    %v959 = vunpack.c.l.b16 %v926
    %v960 = vunpack.c.l.b16 %v927
    %v961 = vpack.c.b16 %v946, %v945
    %v962 = vpack.c.b16 %v948, %v947
    %v963 = vpack.c.b16 %v950, %v949
    %v964 = vpack.c.b16 %v952, %v951
    %v965 = vpack.c.b16 %v954, %v953
    %v966 = vpack.c.b16 %v956, %v955
    %v967 = vpack.c.b16 %v958, %v957
    %v968 = vpack.c.b16 %v960, %v959
    %977 = vmatpush.bf16.msra.mxu0 %v968
    %978 = vmatpush.bf16.msra.mxu0 %v967
    %979 = vmatpush.bf16.msra.mxu0 %v966
    %980 = vmatpush.bf16.msra.mxu0 %v965
    %981 = vmatpush.bf16.msra.mxu0 %v964
    %982 = vmatpush.bf16.msra.mxu0 %v963
    %983 = vmatpush.bf16.msra.mxu0 %v962
    %984 = vmatpush.bf16.msra.mxu0 %v961
    %985 = vmatmul.bf16.gmra.mxu0 %v911
    %v986 = vpop.f32.mrf.mxu0
    %v987 = vadd.f32 %v928, %v986
    %v988 = vpop.f32.mrf.mxu0
    %v989 = vadd.f32 %v928, %v988
    %990 = vdwg.mxu0
    %v991 = vadd.f32 %v854, %v987
    %v992 = vadd.f32 %v855, %v989
    %v993 = vsel %vm63, %v991, 0.0
    %994 = vadd.xlane.f32.xlu0 %v993
    %v995 = vpop.xlane.xlu0 %994
    %v996 = vsel %vm63, %v992, 0.0
    %997 = vadd.xlane.f32.xlu0 %v996
    %v998 = vpop.xlane.xlu0 %997
    %v999 = vmul.f32 %v991, %v991
    %v1000 = vmul.f32 %v992, %v992
    %v1001 = vsel %vm63, %v999, 0.0
    %1002 = vadd.xlane.f32.xlu0 %v1001
    %v1003 = vpop.xlane.xlu0 %1002
    %v1004 = vsel %vm63, %v1000, 0.0
    %1005 = vadd.xlane.f32.xlu0 %v1004
    %v1006 = vpop.xlane.xlu0 %1005
    %v1007 = vmul.f32 %v995, 0.015625
    %v1008 = vmul.f32 %v998, 0.015625
    %v1009 = vmul.f32 %v1003, 0.015625
    %v1010 = vmul.f32 %v1006, 0.015625
    %v1011 = vmul.f32 %v1007, %v1007
    %v1012 = vmul.f32 %v1008, %v1008
    %v1013 = vsub.f32 %v1009, %v1011
    %v1014 = vsub.f32 %v1010, %v1012
    %v1015 = vmax.f32 %v1013, 0.0
    %v1016 = vmax.f32 %v1014, 0.0
    %v1017 = vsub.f32 %v991, %v1007
    %v1018 = vsub.f32 %v992, %v1008
    %v1019 = vadd.f32 %v1015, 1e-05
    %v1020 = vadd.f32 %v1016, 1e-05
    %v1021 = vrsqrt.pop %v1019
    %v1022 = vmul.f32 %v1021, %v1019
    %v1023 = vmul.f32 %v1022, %v1021
    %v1024 = vmul.f32 0.5, %v1023
    %v1025 = vsub.f32 1.5, %v1024
    %v1026 = vmul.f32 %v1021, %v1025
    %vm1027 = vweird.f32 %v1019
    %vm1028 = vweird.f32 %v1021
    %vm1029 = vmor %vm1027, %vm1028
    %v1030 = vsel %vm1029, %v1021, %v1026
    %v1031 = vrsqrt.pop %v1020
    %v1032 = vmul.f32 %v1031, %v1020
    %v1033 = vmul.f32 %v1032, %v1031
    %v1034 = vmul.f32 0.5, %v1033
    %v1035 = vsub.f32 1.5, %v1034
    %v1036 = vmul.f32 %v1031, %v1035
    %vm1037 = vweird.f32 %v1020
    %vm1038 = vweird.f32 %v1031
    %vm1039 = vmor %vm1037, %vm1038
    %v1040 = vsel %vm1039, %v1031, %v1036
    %v1041 = vmul.f32 %v1017, %v1030
    %v1042 = vmul.f32 %v1018, %v1040
    %v1043 = vperm.slane %v83, 6
    %v1044 = vmul.f32 %v1041, %v1043
    %v1045 = vmul.f32 %v1042, %v1043
    %v1046 = vperm.slane %v83, 7
    %v1047 = vadd.f32 %v1044, %v1046
    %v1048 = vadd.f32 %v1045, %v1046
    %s1049 = scalar_lea.vmem %s10, 16
    %v1050 = vld [vmem:[%s1049] sm:$0xff]
    %v1051 = vld [vmem:[%s1049 + $0x8] sm:$0xff]
    %s1052 = scalar_lea.vmem %s11, 1
    %v1053 = vld [vmem:[%s1052] sm:$0x1]
    %v1054 = vpack.c.bf16 %v1048, %v1047
    %s1055 = scalar_lea.vmem %s4, 32
    %v1056 = vld [vmem:[%s1055] sm:$0xf]
    %v1057 = vld [vmem:[%s1055 + $0x4] sm:$0xf]
    %v1058 = vld [vmem:[%s1055 + $0x8] sm:$0xf]
    %v1059 = vld [vmem:[%s1055 + $0xc] sm:$0xf]
    %v1060 = vld [vmem:[%s1055 + $0x10] sm:$0xf]
    %v1061 = vld [vmem:[%s1055 + $0x14] sm:$0xf]
    %v1062 = vld [vmem:[%s1055 + $0x18] sm:$0xf]
    %v1063 = vld [vmem:[%s1055 + $0x1c] sm:$0xf]
    %v1064 = vperm.slane %v1050, 0
    %v1073 = vunpack.c.l.b16 %v1056
    %v1074 = vunpack.c.l.b16 %v1057
    %v1075 = vunpack.c.l.b16 %v1058
    %v1076 = vunpack.c.l.b16 %v1059
    %v1077 = vunpack.c.l.b16 %v1060
    %v1078 = vunpack.c.l.b16 %v1061
    %v1079 = vunpack.c.l.b16 %v1062
    %v1080 = vunpack.c.l.b16 %v1063
    %v1081 = vpack.c.b16 %v1074, %v1073
    %v1082 = vpack.c.b16 %v1076, %v1075
    %v1083 = vpack.c.b16 %v1078, %v1077
    %v1084 = vpack.c.b16 %v1080, %v1079
    %v1090 = vsel %vm63, %v1054, 0
    %1092 = vmatpush.bf16.msra.mxu0 0
    %1093 = vmatpush.bf16.msra.mxu0 0
    %1094 = vmatpush.bf16.msra.mxu0 0
    %1095 = vmatpush.bf16.msra.mxu0 0
    %1096 = vmatpush.bf16.msra.mxu0 %v1084
    %1097 = vmatpush.bf16.msra.mxu0 %v1083
    %1098 = vmatpush.bf16.msra.mxu0 %v1082
    %1099 = vmatpush.bf16.msra.mxu0 %v1081
    %1100 = vmatmul.bf16.gmra.mxu0 %v1090
    %v1101 = vpop.f32.mrf.mxu0
    %v1102 = vadd.f32 %v1064, %v1101
    %v1103 = vpop.f32.mrf.mxu0
    %v1104 = vadd.f32 %v1064, %v1103
    %1105 = vdwg.mxu0
    %s1106 = scalar_lea.vmem %s5, 32
    %v1107 = vld [vmem:[%s1106] sm:$0xf]
    %v1108 = vld [vmem:[%s1106 + $0x4] sm:$0xf]
    %v1109 = vld [vmem:[%s1106 + $0x8] sm:$0xf]
    %v1110 = vld [vmem:[%s1106 + $0xc] sm:$0xf]
    %v1111 = vld [vmem:[%s1106 + $0x10] sm:$0xf]
    %v1112 = vld [vmem:[%s1106 + $0x14] sm:$0xf]
    %v1113 = vld [vmem:[%s1106 + $0x18] sm:$0xf]
    %v1114 = vld [vmem:[%s1106 + $0x1c] sm:$0xf]
    %v1115 = vperm.slane %v1050, 1
    %v1124 = vunpack.c.l.b16 %v1107
    %v1125 = vunpack.c.l.b16 %v1108
    %v1126 = vunpack.c.l.b16 %v1109
    %v1127 = vunpack.c.l.b16 %v1110
    %v1128 = vunpack.c.l.b16 %v1111
    %v1129 = vunpack.c.l.b16 %v1112
    %v1130 = vunpack.c.l.b16 %v1113
    %v1131 = vunpack.c.l.b16 %v1114
    %v1132 = vpack.c.b16 %v1125, %v1124
    %v1133 = vpack.c.b16 %v1127, %v1126
    %v1134 = vpack.c.b16 %v1129, %v1128
    %v1135 = vpack.c.b16 %v1131, %v1130
    %1140 = vmatpush.bf16.msra.mxu0 0
    %1141 = vmatpush.bf16.msra.mxu0 0
    %1142 = vmatpush.bf16.msra.mxu0 0
    %1143 = vmatpush.bf16.msra.mxu0 0
    %1144 = vmatpush.bf16.msra.mxu0 %v1135
    %1145 = vmatpush.bf16.msra.mxu0 %v1134
    %1146 = vmatpush.bf16.msra.mxu0 %v1133
    %1147 = vmatpush.bf16.msra.mxu0 %v1132
    %1148 = vmatmul.bf16.gmra.mxu0 %v1090
    %v1149 = vpop.f32.mrf.mxu0
    %v1150 = vadd.f32 %v1115, %v1149
    %v1151 = vpop.f32.mrf.mxu0
    %v1152 = vadd.f32 %v1115, %v1151
    %1153 = vdwg.mxu0
    %s1154 = scalar_lea.vmem %s6, 32
    %v1155 = vld [vmem:[%s1154] sm:$0xf]
    %v1156 = vld [vmem:[%s1154 + $0x4] sm:$0xf]
    %v1157 = vld [vmem:[%s1154 + $0x8] sm:$0xf]
    %v1158 = vld [vmem:[%s1154 + $0xc] sm:$0xf]
    %v1159 = vld [vmem:[%s1154 + $0x10] sm:$0xf]
    %v1160 = vld [vmem:[%s1154 + $0x14] sm:$0xf]
    %v1161 = vld [vmem:[%s1154 + $0x18] sm:$0xf]
    %v1162 = vld [vmem:[%s1154 + $0x1c] sm:$0xf]
    %v1163 = vperm.slane %v1050, 2
    %v1172 = vunpack.c.l.b16 %v1155
    %v1173 = vunpack.c.l.b16 %v1156
    %v1174 = vunpack.c.l.b16 %v1157
    %v1175 = vunpack.c.l.b16 %v1158
    %v1176 = vunpack.c.l.b16 %v1159
    %v1177 = vunpack.c.l.b16 %v1160
    %v1178 = vunpack.c.l.b16 %v1161
    %v1179 = vunpack.c.l.b16 %v1162
    %v1180 = vpack.c.b16 %v1173, %v1172
    %v1181 = vpack.c.b16 %v1175, %v1174
    %v1182 = vpack.c.b16 %v1177, %v1176
    %v1183 = vpack.c.b16 %v1179, %v1178
    %1188 = vmatpush.bf16.msra.mxu0 0
    %1189 = vmatpush.bf16.msra.mxu0 0
    %1190 = vmatpush.bf16.msra.mxu0 0
    %1191 = vmatpush.bf16.msra.mxu0 0
    %1192 = vmatpush.bf16.msra.mxu0 %v1183
    %1193 = vmatpush.bf16.msra.mxu0 %v1182
    %1194 = vmatpush.bf16.msra.mxu0 %v1181
    %1195 = vmatpush.bf16.msra.mxu0 %v1180
    %1196 = vmatmul.bf16.gmra.mxu0 %v1090
    %v1197 = vpop.f32.mrf.mxu0
    %v1198 = vadd.f32 %v1163, %v1197
    %v1199 = vpop.f32.mrf.mxu0
    %v1200 = vadd.f32 %v1163, %v1199
    %1201 = vdwg.mxu0
    %v1202 = vpack.c.bf16 %v1102, %v1102
    %v1203 = vpack.c.bf16 %v1104, %v1104
    %v1204 = vpack.c.bf16 %v1150, %v1150
    %v1205 = vpack.c.bf16 %v1152, %v1152
    %v1206 = vpack.c.bf16 %v1198, %v1198
    %v1207 = vpack.c.bf16 %v1200, %v1200
    %v1208 = vunpack.c.l.bf16 %v1204
    %v1209 = vunpack.c.l.bf16 %v1205
    %v1210 = vmul.f32 %v1208, %v243
    %v1211 = vmul.f32 %v1209, %v243
    %v1212 = vpack.c.bf16 %v1210, %v1210
    %v1213 = vpack.c.bf16 %v1211, %v1211
    %v1214 = vunpack.c.l.bf16 %v1206
    %v1215 = vunpack.c.l.bf16 %v1207
    %v1216 = vmul.f32 %v1214, %v243
    %v1217 = vmul.f32 %v1215, %v243
    %v1218 = vpack.c.bf16 %v1216, %v1216
    %v1219 = vpack.c.bf16 %v1217, %v1217
    %v1222 = vunpack.c.l.b16 %v1202
    %v1223 = vunpack.c.l.b16 %v1203
    %v1224 = vpack.c.b16 %v1223, %v1222
    %v1227 = vunpack.c.l.b16 %v1212
    %v1228 = vunpack.c.l.b16 %v1213
    %v1229 = vpack.c.b16 %v1228, %v1227
    %v1231 = vsel %vm63, %v1224, 0
    %v1234 = vsel %vm63, %v1229, 0
    %1236 = vmatpush.bf16.xpose.msra.mxu0 0
    %1237 = vmatpush.bf16.xpose.msra.mxu0 0
    %1238 = vmatpush.bf16.xpose.msra.mxu0 0
    %1239 = vmatpush.bf16.xpose.msra.mxu0 0
    %1240 = vmatpush.bf16.xpose.msra.mxu0 0
    %1241 = vmatpush.bf16.xpose.msra.mxu0 0
    %1242 = vmatpush.bf16.xpose.msra.mxu0 0
    %1243 = vmatpush.bf16.xpose.msra.mxu0 %v1234
    %1244 = vmatmul.bf16.gmra.mxu0 %v1231
    %v1245 = vpop.f32.mrf.mxu0
    %v1246 = vadd.f32 0.0, %v1245
    %v1247 = vpop.f32.mrf.mxu0
    %v1248 = vadd.f32 0.0, %v1247
    %1249 = vdwg.mxu0
    %v1250 = vmul.f32 %v1246, 0.25
    %v1251 = vmul.f32 %v1248, 0.25
    %v1252 = vadd.f32 %v1250, %v80
    %v1253 = vadd.f32 %v1251, %v81
    %v1254 = vadd.f32 %v1252, %v309
    %v1255 = vadd.f32 %v1253, %v309
    %v1256 = vsel %vm313, %v1254, -inf
    %1257 = vmax.xlane.f32.xlu0 %v1256
    %v1258 = vpop.xlane.xlu0 %1257
    %v1259 = vsel %vm313, %v1255, -inf
    %1260 = vmax.xlane.f32.xlu0 %v1259
    %v1261 = vpop.xlane.xlu0 %1260
    %v1262 = vsub.f32 %v1254, %v1258
    %v1263 = vsub.f32 %v1255, %v1261
    %v1264 = vmul.f32 %v1262, 1.442695
    %v1265 = vpow.pop %v1264
    %v1266 = vmul.f32 %v1263, 1.442695
    %v1267 = vpow.pop %v1266
    %v1268 = vsel %vm313, %v1265, 0.0
    %1269 = vadd.xlane.f32.xlu0 %v1268
    %v1270 = vpop.xlane.xlu0 %1269
    %v1271 = vsel %vm313, %v1267, 0.0
    %1272 = vadd.xlane.f32.xlu0 %v1271
    %v1273 = vpop.xlane.xlu0 %1272
    %v1274 = vrcp.pop %v1270
    %v1275 = vmul.f32 %v1270, %v1274
    %v1276 = vsub.f32 1.0, %v1275
    %v1277 = vmul.f32 %v1274, %v1276
    %v1278 = vadd.f32 %v1274, %v1277
    %vm1279 = vweird.f32 %v1270
    %vm1280 = vweird.f32 %v1274
    %vm1281 = vmor %vm1279, %vm1280
    %v1282 = vsel %vm1281, %v1274, %v1278
    %v1283 = vand.u32 2147483647, %v1270
    %vm1284 = vcmp.eq.f32.partialorder %v1283, 8.507059e+37
    %v1285 = vand.u32 %v1270, 2147483648
    %v1286 = vor.u32 1.1754944e-38, %v1285
    %v1287 = vsel %vm1284, %v1286, %v1282
    %v1288 = vmul.f32 %v1265, %v1287
    %v1289 = vrcp.pop %v1273
    %v1290 = vmul.f32 %v1273, %v1289
    %v1291 = vsub.f32 1.0, %v1290
    %v1292 = vmul.f32 %v1289, %v1291
    %v1293 = vadd.f32 %v1289, %v1292
    %vm1294 = vweird.f32 %v1273
    %vm1295 = vweird.f32 %v1289
    %vm1296 = vmor %vm1294, %vm1295
    %v1297 = vsel %vm1296, %v1289, %v1293
    %v1298 = vand.u32 2147483647, %v1273
    %vm1299 = vcmp.eq.f32.partialorder %v1298, 8.507059e+37
    %v1300 = vand.u32 %v1273, 2147483648
    %v1301 = vor.u32 1.1754944e-38, %v1300
    %v1302 = vsel %vm1299, %v1301, %v1297
    %v1303 = vmul.f32 %v1267, %v1302
    %v1304 = vpack.c.bf16 %v1288, %v1288
    %v1305 = vpack.c.bf16 %v1303, %v1303
    %v1306 = vmul.f32 %v1208, %v368
    %v1307 = vmul.f32 %v1209, %v368
    %v1308 = vpack.c.bf16 %v1306, %v1306
    %v1309 = vpack.c.bf16 %v1307, %v1307
    %v1310 = vmul.f32 %v1214, %v368
    %v1311 = vmul.f32 %v1215, %v368
    %v1312 = vpack.c.bf16 %v1310, %v1310
    %v1313 = vpack.c.bf16 %v1311, %v1311
    %v1316 = vunpack.c.l.b16 %v1308
    %v1317 = vunpack.c.l.b16 %v1309
    %v1318 = vpack.c.b16 %v1317, %v1316
    %v1320 = vsel %vm63, %v1318, 0
    %1322 = vmatpush.bf16.xpose.msra.mxu0 0
    %1323 = vmatpush.bf16.xpose.msra.mxu0 0
    %1324 = vmatpush.bf16.xpose.msra.mxu0 0
    %1325 = vmatpush.bf16.xpose.msra.mxu0 0
    %1326 = vmatpush.bf16.xpose.msra.mxu0 0
    %1327 = vmatpush.bf16.xpose.msra.mxu0 0
    %1328 = vmatpush.bf16.xpose.msra.mxu0 0
    %1329 = vmatpush.bf16.xpose.msra.mxu0 %v1320
    %1330 = vmatmul.bf16.gmra.mxu0 %v1231
    %v1331 = vpop.f32.mrf.mxu0
    %v1332 = vadd.f32 0.0, %v1331
    %v1333 = vpop.f32.mrf.mxu0
    %v1334 = vadd.f32 0.0, %v1333
    %1335 = vdwg.mxu0
    %v1336 = vmul.f32 %v1332, 0.25
    %v1337 = vmul.f32 %v1334, 0.25
    %v1338 = vadd.f32 %v1336, %v80
    %v1339 = vadd.f32 %v1337, %v81
    %v1340 = vadd.f32 %v1338, %v309
    %v1341 = vadd.f32 %v1339, %v309
    %v1342 = vsel %vm313, %v1340, -inf
    %1343 = vmax.xlane.f32.xlu0 %v1342
    %v1344 = vpop.xlane.xlu0 %1343
    %v1345 = vsel %vm313, %v1341, -inf
    %1346 = vmax.xlane.f32.xlu0 %v1345
    %v1347 = vpop.xlane.xlu0 %1346
    %v1348 = vsub.f32 %v1340, %v1344
    %v1349 = vsub.f32 %v1341, %v1347
    %v1350 = vmul.f32 %v1348, 1.442695
    %v1351 = vpow.pop %v1350
    %v1352 = vmul.f32 %v1349, 1.442695
    %v1353 = vpow.pop %v1352
    %v1354 = vsel %vm313, %v1351, 0.0
    %1355 = vadd.xlane.f32.xlu0 %v1354
    %v1356 = vpop.xlane.xlu0 %1355
    %v1357 = vsel %vm313, %v1353, 0.0
    %1358 = vadd.xlane.f32.xlu0 %v1357
    %v1359 = vpop.xlane.xlu0 %1358
    %v1360 = vrcp.pop %v1356
    %v1361 = vmul.f32 %v1356, %v1360
    %v1362 = vsub.f32 1.0, %v1361
    %v1363 = vmul.f32 %v1360, %v1362
    %v1364 = vadd.f32 %v1360, %v1363
    %vm1365 = vweird.f32 %v1356
    %vm1366 = vweird.f32 %v1360
    %vm1367 = vmor %vm1365, %vm1366
    %v1368 = vsel %vm1367, %v1360, %v1364
    %v1369 = vand.u32 2147483647, %v1356
    %vm1370 = vcmp.eq.f32.partialorder %v1369, 8.507059e+37
    %v1371 = vand.u32 %v1356, 2147483648
    %v1372 = vor.u32 1.1754944e-38, %v1371
    %v1373 = vsel %vm1370, %v1372, %v1368
    %v1374 = vmul.f32 %v1351, %v1373
    %v1375 = vrcp.pop %v1359
    %v1376 = vmul.f32 %v1359, %v1375
    %v1377 = vsub.f32 1.0, %v1376
    %v1378 = vmul.f32 %v1375, %v1377
    %v1379 = vadd.f32 %v1375, %v1378
    %vm1380 = vweird.f32 %v1359
    %vm1381 = vweird.f32 %v1375
    %vm1382 = vmor %vm1380, %vm1381
    %v1383 = vsel %vm1382, %v1375, %v1379
    %v1384 = vand.u32 2147483647, %v1359
    %vm1385 = vcmp.eq.f32.partialorder %v1384, 8.507059e+37
    %v1386 = vand.u32 %v1359, 2147483648
    %v1387 = vor.u32 1.1754944e-38, %v1386
    %v1388 = vsel %vm1385, %v1387, %v1383
    %v1389 = vmul.f32 %v1353, %v1388
    %v1390 = vpack.c.bf16 %v1374, %v1374
    %v1391 = vpack.c.bf16 %v1389, %v1389
    %v1394 = vunpack.c.l.b16 %v1390
    %v1395 = vunpack.c.l.b16 %v1391
    %v1396 = vpack.c.b16 %v1395, %v1394
    %v1399 = vunpack.c.l.b16 %v1312
    %v1400 = vunpack.c.l.b16 %v1313
    %v1401 = vpack.c.b16 %v1400, %v1399
    %v1404 = vsel %vm313, %v1396, 0
    %1406 = vmatpush.bf16.msra.mxu0 0
    %1407 = vmatpush.bf16.msra.mxu0 0
    %1408 = vmatpush.bf16.msra.mxu0 0
    %1409 = vmatpush.bf16.msra.mxu0 0
    %1410 = vmatpush.bf16.msra.mxu0 0
    %1411 = vmatpush.bf16.msra.mxu0 0
    %1412 = vmatpush.bf16.msra.mxu0 0
    %1413 = vmatpush.bf16.msra.mxu0 %v1401
    %1414 = vmatmul.bf16.gmra.mxu0 %v1404
    %v1415 = vpop.f32.mrf.mxu0
    %v1416 = vadd.f32 0.0, %v1415
    %v1417 = vpop.f32.mrf.mxu0
    %v1418 = vadd.f32 0.0, %v1417
    %1419 = vdwg.mxu0
    %v1422 = vunpack.c.l.b16 %v1304
    %v1423 = vunpack.c.l.b16 %v1305
    %v1424 = vpack.c.b16 %v1423, %v1422
    %v1427 = vunpack.c.l.b16 %v1218
    %v1428 = vunpack.c.l.b16 %v1219
    %v1429 = vpack.c.b16 %v1428, %v1427
    %v1432 = vsel %vm313, %v1424, 0
    %1434 = vmatpush.bf16.msra.mxu0 0
    %1435 = vmatpush.bf16.msra.mxu0 0
    %1436 = vmatpush.bf16.msra.mxu0 0
    %1437 = vmatpush.bf16.msra.mxu0 0
    %1438 = vmatpush.bf16.msra.mxu0 0
    %1439 = vmatpush.bf16.msra.mxu0 0
    %1440 = vmatpush.bf16.msra.mxu0 0
    %1441 = vmatpush.bf16.msra.mxu0 %v1429
    %1442 = vmatmul.bf16.gmra.mxu0 %v1432
    %v1443 = vpop.f32.mrf.mxu0
    %v1444 = vadd.f32 %v1416, %v1443
    %v1445 = vpop.f32.mrf.mxu0
    %v1446 = vadd.f32 %v1418, %v1445
    %1447 = vdwg.mxu0
    %v1448 = vmul.f32 %v1208, %v512
    %v1449 = vmul.f32 %v1209, %v512
    %v1450 = vpack.c.bf16 %v1448, %v1448
    %v1451 = vpack.c.bf16 %v1449, %v1449
    %v1452 = vmul.f32 %v1214, %v512
    %v1453 = vmul.f32 %v1215, %v512
    %v1454 = vpack.c.bf16 %v1452, %v1452
    %v1455 = vpack.c.bf16 %v1453, %v1453
    %v1458 = vunpack.c.l.b16 %v1450
    %v1459 = vunpack.c.l.b16 %v1451
    %v1460 = vpack.c.b16 %v1459, %v1458
    %v1462 = vsel %vm63, %v1460, 0
    %1464 = vmatpush.bf16.xpose.msra.mxu0 0
    %1465 = vmatpush.bf16.xpose.msra.mxu0 0
    %1466 = vmatpush.bf16.xpose.msra.mxu0 0
    %1467 = vmatpush.bf16.xpose.msra.mxu0 0
    %1468 = vmatpush.bf16.xpose.msra.mxu0 0
    %1469 = vmatpush.bf16.xpose.msra.mxu0 0
    %1470 = vmatpush.bf16.xpose.msra.mxu0 0
    %1471 = vmatpush.bf16.xpose.msra.mxu0 %v1462
    %1472 = vmatmul.bf16.gmra.mxu0 %v1231
    %v1473 = vpop.f32.mrf.mxu0
    %v1474 = vadd.f32 0.0, %v1473
    %v1475 = vpop.f32.mrf.mxu0
    %v1476 = vadd.f32 0.0, %v1475
    %1477 = vdwg.mxu0
    %v1478 = vmul.f32 %v1474, 0.25
    %v1479 = vmul.f32 %v1476, 0.25
    %v1480 = vadd.f32 %v1478, %v80
    %v1481 = vadd.f32 %v1479, %v81
    %v1482 = vadd.f32 %v1480, %v309
    %v1483 = vadd.f32 %v1481, %v309
    %v1484 = vsel %vm313, %v1482, -inf
    %1485 = vmax.xlane.f32.xlu0 %v1484
    %v1486 = vpop.xlane.xlu0 %1485
    %v1487 = vsel %vm313, %v1483, -inf
    %1488 = vmax.xlane.f32.xlu0 %v1487
    %v1489 = vpop.xlane.xlu0 %1488
    %v1490 = vsub.f32 %v1482, %v1486
    %v1491 = vsub.f32 %v1483, %v1489
    %v1492 = vmul.f32 %v1490, 1.442695
    %v1493 = vpow.pop %v1492
    %v1494 = vmul.f32 %v1491, 1.442695
    %v1495 = vpow.pop %v1494
    %v1496 = vsel %vm313, %v1493, 0.0
    %1497 = vadd.xlane.f32.xlu0 %v1496
    %v1498 = vpop.xlane.xlu0 %1497
    %v1499 = vsel %vm313, %v1495, 0.0
    %1500 = vadd.xlane.f32.xlu0 %v1499
    %v1501 = vpop.xlane.xlu0 %1500
    %v1502 = vrcp.pop %v1498
    %v1503 = vmul.f32 %v1498, %v1502
    %v1504 = vsub.f32 1.0, %v1503
    %v1505 = vmul.f32 %v1502, %v1504
    %v1506 = vadd.f32 %v1502, %v1505
    %vm1507 = vweird.f32 %v1498
    %vm1508 = vweird.f32 %v1502
    %vm1509 = vmor %vm1507, %vm1508
    %v1510 = vsel %vm1509, %v1502, %v1506
    %v1511 = vand.u32 2147483647, %v1498
    %vm1512 = vcmp.eq.f32.partialorder %v1511, 8.507059e+37
    %v1513 = vand.u32 %v1498, 2147483648
    %v1514 = vor.u32 1.1754944e-38, %v1513
    %v1515 = vsel %vm1512, %v1514, %v1510
    %v1516 = vmul.f32 %v1493, %v1515
    %v1517 = vrcp.pop %v1501
    %v1518 = vmul.f32 %v1501, %v1517
    %v1519 = vsub.f32 1.0, %v1518
    %v1520 = vmul.f32 %v1517, %v1519
    %v1521 = vadd.f32 %v1517, %v1520
    %vm1522 = vweird.f32 %v1501
    %vm1523 = vweird.f32 %v1517
    %vm1524 = vmor %vm1522, %vm1523
    %v1525 = vsel %vm1524, %v1517, %v1521
    %v1526 = vand.u32 2147483647, %v1501
    %vm1527 = vcmp.eq.f32.partialorder %v1526, 8.507059e+37
    %v1528 = vand.u32 %v1501, 2147483648
    %v1529 = vor.u32 1.1754944e-38, %v1528
    %v1530 = vsel %vm1527, %v1529, %v1525
    %v1531 = vmul.f32 %v1495, %v1530
    %v1532 = vpack.c.bf16 %v1516, %v1516
    %v1533 = vpack.c.bf16 %v1531, %v1531
    %v1536 = vunpack.c.l.b16 %v1532
    %v1537 = vunpack.c.l.b16 %v1533
    %v1538 = vpack.c.b16 %v1537, %v1536
    %v1541 = vunpack.c.l.b16 %v1454
    %v1542 = vunpack.c.l.b16 %v1455
    %v1543 = vpack.c.b16 %v1542, %v1541
    %v1546 = vsel %vm313, %v1538, 0
    %1548 = vmatpush.bf16.msra.mxu0 0
    %1549 = vmatpush.bf16.msra.mxu0 0
    %1550 = vmatpush.bf16.msra.mxu0 0
    %1551 = vmatpush.bf16.msra.mxu0 0
    %1552 = vmatpush.bf16.msra.mxu0 0
    %1553 = vmatpush.bf16.msra.mxu0 0
    %1554 = vmatpush.bf16.msra.mxu0 0
    %1555 = vmatpush.bf16.msra.mxu0 %v1543
    %1556 = vmatmul.bf16.gmra.mxu0 %v1546
    %v1557 = vpop.f32.mrf.mxu0
    %v1558 = vadd.f32 0.0, %v1557
    %v1559 = vpop.f32.mrf.mxu0
    %v1560 = vadd.f32 0.0, %v1559
    %1561 = vdwg.mxu0
    %v1562 = vadd.f32 %v1444, %v1558
    %v1563 = vadd.f32 %v1446, %v1560
    %v1564 = vmul.f32 %v1208, %v630
    %v1565 = vmul.f32 %v1209, %v630
    %v1566 = vpack.c.bf16 %v1564, %v1564
    %v1567 = vpack.c.bf16 %v1565, %v1565
    %v1568 = vmul.f32 %v1214, %v630
    %v1569 = vmul.f32 %v1215, %v630
    %v1570 = vpack.c.bf16 %v1568, %v1568
    %v1571 = vpack.c.bf16 %v1569, %v1569
    %v1574 = vunpack.c.l.b16 %v1566
    %v1575 = vunpack.c.l.b16 %v1567
    %v1576 = vpack.c.b16 %v1575, %v1574
    %v1578 = vsel %vm63, %v1576, 0
    %1580 = vmatpush.bf16.xpose.msra.mxu0 0
    %1581 = vmatpush.bf16.xpose.msra.mxu0 0
    %1582 = vmatpush.bf16.xpose.msra.mxu0 0
    %1583 = vmatpush.bf16.xpose.msra.mxu0 0
    %1584 = vmatpush.bf16.xpose.msra.mxu0 0
    %1585 = vmatpush.bf16.xpose.msra.mxu0 0
    %1586 = vmatpush.bf16.xpose.msra.mxu0 0
    %1587 = vmatpush.bf16.xpose.msra.mxu0 %v1578
    %1588 = vmatmul.bf16.gmra.mxu0 %v1231
    %v1589 = vpop.f32.mrf.mxu0
    %v1590 = vadd.f32 0.0, %v1589
    %v1591 = vpop.f32.mrf.mxu0
    %v1592 = vadd.f32 0.0, %v1591
    %1593 = vdwg.mxu0
    %v1594 = vmul.f32 %v1590, 0.25
    %v1595 = vmul.f32 %v1592, 0.25
    %v1596 = vadd.f32 %v1594, %v80
    %v1597 = vadd.f32 %v1595, %v81
    %v1598 = vadd.f32 %v1596, %v309
    %v1599 = vadd.f32 %v1597, %v309
    %v1600 = vsel %vm313, %v1598, -inf
    %1601 = vmax.xlane.f32.xlu0 %v1600
    %v1602 = vpop.xlane.xlu0 %1601
    %v1603 = vsel %vm313, %v1599, -inf
    %1604 = vmax.xlane.f32.xlu0 %v1603
    %v1605 = vpop.xlane.xlu0 %1604
    %v1606 = vsub.f32 %v1598, %v1602
    %v1607 = vsub.f32 %v1599, %v1605
    %v1608 = vmul.f32 %v1606, 1.442695
    %v1609 = vpow.pop %v1608
    %v1610 = vmul.f32 %v1607, 1.442695
    %v1611 = vpow.pop %v1610
    %v1612 = vsel %vm313, %v1609, 0.0
    %1613 = vadd.xlane.f32.xlu0 %v1612
    %v1614 = vpop.xlane.xlu0 %1613
    %v1615 = vsel %vm313, %v1611, 0.0
    %1616 = vadd.xlane.f32.xlu0 %v1615
    %v1617 = vpop.xlane.xlu0 %1616
    %v1618 = vrcp.pop %v1614
    %v1619 = vmul.f32 %v1614, %v1618
    %v1620 = vsub.f32 1.0, %v1619
    %v1621 = vmul.f32 %v1618, %v1620
    %v1622 = vadd.f32 %v1618, %v1621
    %vm1623 = vweird.f32 %v1614
    %vm1624 = vweird.f32 %v1618
    %vm1625 = vmor %vm1623, %vm1624
    %v1626 = vsel %vm1625, %v1618, %v1622
    %v1627 = vand.u32 2147483647, %v1614
    %vm1628 = vcmp.eq.f32.partialorder %v1627, 8.507059e+37
    %v1629 = vand.u32 %v1614, 2147483648
    %v1630 = vor.u32 1.1754944e-38, %v1629
    %v1631 = vsel %vm1628, %v1630, %v1626
    %v1632 = vmul.f32 %v1609, %v1631
    %v1633 = vrcp.pop %v1617
    %v1634 = vmul.f32 %v1617, %v1633
    %v1635 = vsub.f32 1.0, %v1634
    %v1636 = vmul.f32 %v1633, %v1635
    %v1637 = vadd.f32 %v1633, %v1636
    %vm1638 = vweird.f32 %v1617
    %vm1639 = vweird.f32 %v1633
    %vm1640 = vmor %vm1638, %vm1639
    %v1641 = vsel %vm1640, %v1633, %v1637
    %v1642 = vand.u32 2147483647, %v1617
    %vm1643 = vcmp.eq.f32.partialorder %v1642, 8.507059e+37
    %v1644 = vand.u32 %v1617, 2147483648
    %v1645 = vor.u32 1.1754944e-38, %v1644
    %v1646 = vsel %vm1643, %v1645, %v1641
    %v1647 = vmul.f32 %v1611, %v1646
    %v1648 = vpack.c.bf16 %v1632, %v1632
    %v1649 = vpack.c.bf16 %v1647, %v1647
    %v1652 = vunpack.c.l.b16 %v1648
    %v1653 = vunpack.c.l.b16 %v1649
    %v1654 = vpack.c.b16 %v1653, %v1652
    %v1657 = vunpack.c.l.b16 %v1570
    %v1658 = vunpack.c.l.b16 %v1571
    %v1659 = vpack.c.b16 %v1658, %v1657
    %v1662 = vsel %vm313, %v1654, 0
    %1664 = vmatpush.bf16.msra.mxu0 0
    %1665 = vmatpush.bf16.msra.mxu0 0
    %1666 = vmatpush.bf16.msra.mxu0 0
    %1667 = vmatpush.bf16.msra.mxu0 0
    %1668 = vmatpush.bf16.msra.mxu0 0
    %1669 = vmatpush.bf16.msra.mxu0 0
    %1670 = vmatpush.bf16.msra.mxu0 0
    %1671 = vmatpush.bf16.msra.mxu0 %v1659
    %1672 = vmatmul.bf16.gmra.mxu0 %v1662
    %v1673 = vpop.f32.mrf.mxu0
    %v1674 = vadd.f32 0.0, %v1673
    %v1675 = vpop.f32.mrf.mxu0
    %v1676 = vadd.f32 0.0, %v1675
    %1677 = vdwg.mxu0
    %v1678 = vadd.f32 %v1562, %v1674
    %v1679 = vadd.f32 %v1563, %v1676
    %v1680 = vpack.c.bf16 %v1679, %v1678
    %s1681 = scalar_lea.vmem %s7, 32
    %v1682 = vld [vmem:[%s1681] sm:$0xf]
    %v1683 = vld [vmem:[%s1681 + $0x4] sm:$0xf]
    %v1684 = vld [vmem:[%s1681 + $0x8] sm:$0xf]
    %v1685 = vld [vmem:[%s1681 + $0xc] sm:$0xf]
    %v1686 = vld [vmem:[%s1681 + $0x10] sm:$0xf]
    %v1687 = vld [vmem:[%s1681 + $0x14] sm:$0xf]
    %v1688 = vld [vmem:[%s1681 + $0x18] sm:$0xf]
    %v1689 = vld [vmem:[%s1681 + $0x1c] sm:$0xf]
    %v1690 = vperm.slane %v1050, 3
    %v1699 = vunpack.c.l.b16 %v1682
    %v1700 = vunpack.c.l.b16 %v1683
    %v1701 = vunpack.c.l.b16 %v1684
    %v1702 = vunpack.c.l.b16 %v1685
    %v1703 = vunpack.c.l.b16 %v1686
    %v1704 = vunpack.c.l.b16 %v1687
    %v1705 = vunpack.c.l.b16 %v1688
    %v1706 = vunpack.c.l.b16 %v1689
    %v1707 = vpack.c.b16 %v1700, %v1699
    %v1708 = vpack.c.b16 %v1702, %v1701
    %v1709 = vpack.c.b16 %v1704, %v1703
    %v1710 = vpack.c.b16 %v1706, %v1705
    %v1716 = vsel %vm63, %v1680, 0
    %1718 = vmatpush.bf16.msra.mxu0 0
    %1719 = vmatpush.bf16.msra.mxu0 0
    %1720 = vmatpush.bf16.msra.mxu0 0
    %1721 = vmatpush.bf16.msra.mxu0 0
    %1722 = vmatpush.bf16.msra.mxu0 %v1710
    %1723 = vmatpush.bf16.msra.mxu0 %v1709
    %1724 = vmatpush.bf16.msra.mxu0 %v1708
    %1725 = vmatpush.bf16.msra.mxu0 %v1707
    %1726 = vmatmul.bf16.gmra.mxu0 %v1716
    %v1727 = vpop.f32.mrf.mxu0
    %v1728 = vadd.f32 %v1690, %v1727
    %v1729 = vpop.f32.mrf.mxu0
    %v1730 = vadd.f32 %v1690, %v1729
    %1731 = vdwg.mxu0
    %v1732 = vadd.f32 %v1047, %v1728
    %v1733 = vadd.f32 %v1048, %v1730
    %v1734 = vsel %vm63, %v1732, 0.0
    %1735 = vadd.xlane.f32.xlu0 %v1734
    %v1736 = vpop.xlane.xlu0 %1735
    %v1737 = vsel %vm63, %v1733, 0.0
    %1738 = vadd.xlane.f32.xlu0 %v1737
    %v1739 = vpop.xlane.xlu0 %1738
    %v1740 = vmul.f32 %v1732, %v1732
    %v1741 = vmul.f32 %v1733, %v1733
    %v1742 = vsel %vm63, %v1740, 0.0
    %1743 = vadd.xlane.f32.xlu0 %v1742
    %v1744 = vpop.xlane.xlu0 %1743
    %v1745 = vsel %vm63, %v1741, 0.0
    %1746 = vadd.xlane.f32.xlu0 %v1745
    %v1747 = vpop.xlane.xlu0 %1746
    %v1748 = vmul.f32 %v1736, 0.015625
    %v1749 = vmul.f32 %v1739, 0.015625
    %v1750 = vmul.f32 %v1744, 0.015625
    %v1751 = vmul.f32 %v1747, 0.015625
    %v1752 = vmul.f32 %v1748, %v1748
    %v1753 = vmul.f32 %v1749, %v1749
    %v1754 = vsub.f32 %v1750, %v1752
    %v1755 = vsub.f32 %v1751, %v1753
    %v1756 = vmax.f32 %v1754, 0.0
    %v1757 = vmax.f32 %v1755, 0.0
    %v1758 = vsub.f32 %v1732, %v1748
    %v1759 = vsub.f32 %v1733, %v1749
    %v1760 = vadd.f32 %v1756, 1e-05
    %v1761 = vadd.f32 %v1757, 1e-05
    %v1762 = vrsqrt.pop %v1760
    %v1763 = vmul.f32 %v1762, %v1760
    %v1764 = vmul.f32 %v1763, %v1762
    %v1765 = vmul.f32 0.5, %v1764
    %v1766 = vsub.f32 1.5, %v1765
    %v1767 = vmul.f32 %v1762, %v1766
    %vm1768 = vweird.f32 %v1760
    %vm1769 = vweird.f32 %v1762
    %vm1770 = vmor %vm1768, %vm1769
    %v1771 = vsel %vm1770, %v1762, %v1767
    %v1772 = vrsqrt.pop %v1761
    %v1773 = vmul.f32 %v1772, %v1761
    %v1774 = vmul.f32 %v1773, %v1772
    %v1775 = vmul.f32 0.5, %v1774
    %v1776 = vsub.f32 1.5, %v1775
    %v1777 = vmul.f32 %v1772, %v1776
    %vm1778 = vweird.f32 %v1761
    %vm1779 = vweird.f32 %v1772
    %vm1780 = vmor %vm1778, %vm1779
    %v1781 = vsel %vm1780, %v1772, %v1777
    %v1782 = vmul.f32 %v1758, %v1771
    %v1783 = vmul.f32 %v1759, %v1781
    %v1784 = vperm.slane %v1050, 4
    %v1785 = vmul.f32 %v1782, %v1784
    %v1786 = vmul.f32 %v1783, %v1784
    %v1787 = vperm.slane %v1050, 5
    %v1788 = vadd.f32 %v1785, %v1787
    %v1789 = vadd.f32 %v1786, %v1787
    %v1790 = vpack.c.bf16 %v1789, %v1788
    %s1791 = scalar_lea.vmem [#allocation2], 32
    %v1792 = vld [vmem:[%s1791] sm:$0xf]
    %v1793 = vld [vmem:[%s1791 + $0x4] sm:$0xf]
    %v1794 = vld [vmem:[%s1791 + $0x8] sm:$0xf]
    %v1795 = vld [vmem:[%s1791 + $0xc] sm:$0xf]
    %v1796 = vld [vmem:[%s1791 + $0x10] sm:$0xf]
    %v1797 = vld [vmem:[%s1791 + $0x14] sm:$0xf]
    %v1798 = vld [vmem:[%s1791 + $0x18] sm:$0xf]
    %v1799 = vld [vmem:[%s1791 + $0x1c] sm:$0xf]
    %v1801 = vperm.slane %v1053, 0
    %v1811 = vunpack.c.l.b16 %v1792
    %v1812 = vunpack.c.l.b16 %v1793
    %v1813 = vunpack.c.l.b16 %v1794
    %v1814 = vunpack.c.l.b16 %v1795
    %v1815 = vunpack.c.l.b16 %v1796
    %v1816 = vunpack.c.l.b16 %v1797
    %v1817 = vunpack.c.l.b16 %v1798
    %v1818 = vunpack.c.l.b16 %v1799
    %v1819 = vpack.c.b16 %v1812, %v1811
    %v1820 = vpack.c.b16 %v1814, %v1813
    %v1821 = vpack.c.b16 %v1816, %v1815
    %v1822 = vpack.c.b16 %v1818, %v1817
    %v1828 = vsel %vm63, %v1790, 0
    %1830 = vmatpush.bf16.msra.mxu0 0
    %1831 = vmatpush.bf16.msra.mxu0 0
    %1832 = vmatpush.bf16.msra.mxu0 0
    %1833 = vmatpush.bf16.msra.mxu0 0
    %1834 = vmatpush.bf16.msra.mxu0 %v1822
    %1835 = vmatpush.bf16.msra.mxu0 %v1821
    %1836 = vmatpush.bf16.msra.mxu0 %v1820
    %1837 = vmatpush.bf16.msra.mxu0 %v1819
    %1838 = vmatmul.bf16.gmra.mxu0 %v1828
    %v1839 = vpop.f32.mrf.mxu0
    %v1840 = vadd.f32 %v1801, %v1839
    %v1841 = vpop.f32.mrf.mxu0
    %v1842 = vadd.f32 %v1801, %v1841
    %1843 = vdwg.mxu0
    %v1844 = vmax.f32 %v1840, 0.0
    %v1845 = vmax.f32 %v1842, 0.0
    %v1846 = vpack.c.bf16 %v1845, %v1844
    %s1847 = scalar_lea.vmem %s9, 64
    %v1848 = vld [vmem:[%s1847] sm:$0xf]
    %v1849 = vld [vmem:[%s1847 + $0x4] sm:$0xf]
    %v1850 = vld [vmem:[%s1847 + $0x8] sm:$0xf]
    %v1851 = vld [vmem:[%s1847 + $0xc] sm:$0xf]
    %v1852 = vld [vmem:[%s1847 + $0x10] sm:$0xf]
    %v1853 = vld [vmem:[%s1847 + $0x14] sm:$0xf]
    %v1854 = vld [vmem:[%s1847 + $0x18] sm:$0xf]
    %v1855 = vld [vmem:[%s1847 + $0x1c] sm:$0xf]
    %v1856 = vld [vmem:[%s1847 + $0x20] sm:$0xf]
    %v1857 = vld [vmem:[%s1847 + $0x24] sm:$0xf]
    %v1858 = vld [vmem:[%s1847 + $0x28] sm:$0xf]
    %v1859 = vld [vmem:[%s1847 + $0x2c] sm:$0xf]
    %v1860 = vld [vmem:[%s1847 + $0x30] sm:$0xf]
    %v1861 = vld [vmem:[%s1847 + $0x34] sm:$0xf]
    %v1862 = vld [vmem:[%s1847 + $0x38] sm:$0xf]
    %v1863 = vld [vmem:[%s1847 + $0x3c] sm:$0xf]
    %v1864 = vperm.slane %v1051, 0
    %v1881 = vunpack.c.l.b16 %v1848
    %v1882 = vunpack.c.l.b16 %v1849
    %v1883 = vunpack.c.l.b16 %v1850
    %v1884 = vunpack.c.l.b16 %v1851
    %v1885 = vunpack.c.l.b16 %v1852
    %v1886 = vunpack.c.l.b16 %v1853
    %v1887 = vunpack.c.l.b16 %v1854
    %v1888 = vunpack.c.l.b16 %v1855
    %v1889 = vunpack.c.l.b16 %v1856
    %v1890 = vunpack.c.l.b16 %v1857
    %v1891 = vunpack.c.l.b16 %v1858
    %v1892 = vunpack.c.l.b16 %v1859
    %v1893 = vunpack.c.l.b16 %v1860
    %v1894 = vunpack.c.l.b16 %v1861
    %v1895 = vunpack.c.l.b16 %v1862
    %v1896 = vunpack.c.l.b16 %v1863
    %v1897 = vpack.c.b16 %v1882, %v1881
    %v1898 = vpack.c.b16 %v1884, %v1883
    %v1899 = vpack.c.b16 %v1886, %v1885
    %v1900 = vpack.c.b16 %v1888, %v1887
    %v1901 = vpack.c.b16 %v1890, %v1889
    %v1902 = vpack.c.b16 %v1892, %v1891
    %v1903 = vpack.c.b16 %v1894, %v1893
    %v1904 = vpack.c.b16 %v1896, %v1895
    %1913 = vmatpush.bf16.msra.mxu0 %v1904
    %1914 = vmatpush.bf16.msra.mxu0 %v1903
    %1915 = vmatpush.bf16.msra.mxu0 %v1902
    %1916 = vmatpush.bf16.msra.mxu0 %v1901
    %1917 = vmatpush.bf16.msra.mxu0 %v1900
    %1918 = vmatpush.bf16.msra.mxu0 %v1899
    %1919 = vmatpush.bf16.msra.mxu0 %v1898
    %1920 = vmatpush.bf16.msra.mxu0 %v1897
    %1921 = vmatmul.bf16.gmra.mxu0 %v1846
    %v1922 = vpop.f32.mrf.mxu0
    %v1923 = vadd.f32 %v1864, %v1922
    %v1924 = vpop.f32.mrf.mxu0
    %v1925 = vadd.f32 %v1864, %v1924
    %1926 = vdwg.mxu0
    %v1927 = vadd.f32 %v1788, %v1923
    %v1928 = vadd.f32 %v1789, %v1925
    %v1929 = vsel %vm63, %v1927, 0.0
    %1930 = vadd.xlane.f32.xlu0 %v1929
    %v1931 = vpop.xlane.xlu0 %1930
    %v1932 = vsel %vm63, %v1928, 0.0
    %1933 = vadd.xlane.f32.xlu0 %v1932
    %v1934 = vpop.xlane.xlu0 %1933
    %v1935 = vmul.f32 %v1927, %v1927
    %v1936 = vmul.f32 %v1928, %v1928
    %v1937 = vsel %vm63, %v1935, 0.0
    %1938 = vadd.xlane.f32.xlu0 %v1937
    %v1939 = vpop.xlane.xlu0 %1938
    %v1940 = vsel %vm63, %v1936, 0.0
    %1941 = vadd.xlane.f32.xlu0 %v1940
    %v1942 = vpop.xlane.xlu0 %1941
    %v1943 = vmul.f32 %v1931, 0.015625
    %v1944 = vmul.f32 %v1934, 0.015625
    %v1945 = vmul.f32 %v1939, 0.015625
    %v1946 = vmul.f32 %v1942, 0.015625
    %v1947 = vmul.f32 %v1943, %v1943
    %v1948 = vmul.f32 %v1944, %v1944
    %v1949 = vsub.f32 %v1945, %v1947
    %v1950 = vsub.f32 %v1946, %v1948
    %v1951 = vmax.f32 %v1949, 0.0
    %v1952 = vmax.f32 %v1950, 0.0
    %v1953 = vsub.f32 %v1927, %v1943
    %v1954 = vsub.f32 %v1928, %v1944
    %v1955 = vadd.f32 %v1951, 1e-05
    %v1956 = vadd.f32 %v1952, 1e-05
    %v1957 = vrsqrt.pop %v1955
    %v1958 = vmul.f32 %v1957, %v1955
    %v1959 = vmul.f32 %v1958, %v1957
    %v1960 = vmul.f32 0.5, %v1959
    %v1961 = vsub.f32 1.5, %v1960
    %v1962 = vmul.f32 %v1957, %v1961
    %vm1963 = vweird.f32 %v1955
    %vm1964 = vweird.f32 %v1957
    %vm1965 = vmor %vm1963, %vm1964
    %v1966 = vsel %vm1965, %v1957, %v1962
    %v1967 = vrsqrt.pop %v1956
    %v1968 = vmul.f32 %v1967, %v1956
    %v1969 = vmul.f32 %v1968, %v1967
    %v1970 = vmul.f32 0.5, %v1969
    %v1971 = vsub.f32 1.5, %v1970
    %v1972 = vmul.f32 %v1967, %v1971
    %vm1973 = vweird.f32 %v1956
    %vm1974 = vweird.f32 %v1967
    %vm1975 = vmor %vm1973, %vm1974
    %v1976 = vsel %vm1975, %v1967, %v1972
    %v1977 = vmul.f32 %v1953, %v1966
    %v1978 = vmul.f32 %v1954, %v1976
    %v1979 = vperm.slane %v1050, 6
    %v1980 = vmul.f32 %v1977, %v1979
    %v1981 = vmul.f32 %v1978, %v1979
    %v1982 = vperm.slane %v1050, 7
    %v1983 = vadd.f32 %v1980, %v1982
    %v1984 = vadd.f32 %v1981, %v1982
    %v1987 = vperm.slane %v74, %v291
    %v1988 = vperm.slane %v75, %v291
    %v1989 = vsel %vm297, %v1988, %v1987
    %vm1991 = vcmask 58368
    %v1992 = vsel %vm1991, %v1989, 0.0
    %1993 = vadd.xlane.f32.xlu0 %v1992
    %v1994 = vpop.xlane.xlu0 %1993
    %v1995 = vmax.f32 %v1994, 1.0
    %v1996 = vmul.f32 %v1983, %v74
    %v1997 = vmul.f32 %v1984, %v75
    %v1998 = vsel %vm63, %v1996, 0.0
    %v1999 = vrot.slane %v1998, 4
    %v2000 = vadd.f32 %v1998, %v1999
    %v2001 = vrot.slane %v2000, 2
    %v2002 = vadd.f32 %v2000, %v2001
    %v2003 = vrot.slane %v2002, 1
    %v2004 = vadd.f32 %v2002, %v2003
    %v2005 = vsel %vm63, %v1997, 0.0
    %v2006 = vrot.slane %v2005, 4
    %v2007 = vadd.f32 %v2005, %v2006
    %v2008 = vrot.slane %v2007, 2
    %v2009 = vadd.f32 %v2007, %v2008
    %v2010 = vrot.slane %v2009, 1
    %v2011 = vadd.f32 %v2009, %v2010
    %v2013 = vrot.slane %v1995, 1
    %v2016 = vrcp.pop %v1995
    %v2017 = vmul.f32 %v1995, %v2016
    %v2018 = vsub.f32 1.0, %v2017
    %v2019 = vmul.f32 %v2016, %v2018
    %v2020 = vadd.f32 %v2016, %v2019
    %vm2021 = vweird.f32 %v1995
    %vm2022 = vweird.f32 %v2016
    %vm2023 = vmor %vm2021, %vm2022
    %v2024 = vsel %vm2023, %v2016, %v2020
    %v2025 = vand.u32 2147483647, %v1995
    %vm2026 = vcmp.eq.f32.partialorder %v2025, 8.507059e+37
    %v2027 = vand.u32 %v1995, 2147483648
    %v2028 = vor.u32 1.1754944e-38, %v2027
    %v2029 = vsel %vm2026, %v2028, %v2024
    %v2030 = vmul.f32 %v2004, %v2029
    %v2031 = vrcp.pop %v2013
    %v2032 = vmul.f32 %v2013, %v2031
    %v2033 = vsub.f32 1.0, %v2032
    %v2034 = vmul.f32 %v2031, %v2033
    %v2035 = vadd.f32 %v2031, %v2034
    %vm2036 = vweird.f32 %v2013
    %vm2037 = vweird.f32 %v2031
    %vm2038 = vmor %vm2036, %vm2037
    %v2039 = vsel %vm2038, %v2031, %v2035
    %v2040 = vand.u32 2147483647, %v2013
    %vm2041 = vcmp.eq.f32.partialorder %v2040, 8.507059e+37
    %v2042 = vand.u32 %v2013, 2147483648
    %v2043 = vor.u32 1.1754944e-38, %v2042
    %v2044 = vsel %vm2041, %v2043, %v2039
    %v2045 = vmul.f32 %v2011, %v2044
    %2047 = vrot.lane.b32.xlu0 %v2045, 64
    %v2048 = vpop.permute.xlu0 %2047
    %v2050 = vsel %vm63, %v2030, %v2048
    %2051 = vst [vmem:[%s12] sm:$0x1] %v2050
    // Predicated region
    $region54: #{simple_transformer.1} parent=1 // pred_check
      _
    $region55: #{simple_transformer.1} parent=1 // pred_check_branch
      %2053 = sbr.rel (0) target = $region57
    $region56: #{simple_transformer.1} parent=1 // pred_region
      _
    $region57: #{simple_transformer.1} parent=1 // pred_fallthru
      _
    // Predicated region
    $region58: #{simple_transformer.1} parent=1 // pred_check
      _
    $region59: #{simple_transformer.1} parent=1 // pred_check_branch
      %2055 = sbr.rel (0) target = $region61
    $region60: #{simple_transformer.1} parent=1 // pred_region
      _
    $region61: #{simple_transformer.1} parent=1 // pred_fallthru
      _
    %2056 = vsyncpa [#allocation3], 1

</llo_original>
